<compile_context>
chip_gen: v5e
topology: v5e:2x2
jax: 0.10.0
libtpu: 0.0.40
codegen_flags: <defaults>
</compile_context>

<pallas_src>
import functools

import jax
import jax.numpy as jnp
from jax.experimental import pallas as pl
from jax.experimental.pallas import tpu as pltpu


_LANE = 128     # lane width: output / feature dims padded to multiples of this
_TM = 256       # output row tile
_TK = 512       # reduction (node) tile


def _round_up(x, m):
    return ((x + m - 1) // m) * m


# ---------------------------------------------------------------------------
# Fused GCNConv layer kernel:  out = A_hat @ (X @ W) + b  (+ optional ReLU)
# ---------------------------------------------------------------------------
def _gcn_layer_kernel(a_ref, x_ref, w_ref, b_ref, o_ref, h_ref, acc_ref, *,
                      tk, apply_relu):
    i = pl.program_id(0)          # output row tile
    k = pl.program_id(1)          # reduction (node) tile
    koff = pl.multiple_of(k * tk, tk)

    # First sweep over k (i == 0): materialize H[k-tile] = X[k-tile] @ W into
    # the persistent VMEM scratch.  Later i-tiles reuse it (no HBM round-trip).
    @pl.when(i == 0)
    def _():
        h_blk = jnp.dot(x_ref[pl.ds(koff, tk), :], w_ref[...],
                        preferred_element_type=jnp.float32)
        h_ref[pl.ds(koff, tk), :] = h_blk.astype(h_ref.dtype)

    @pl.when(k == 0)
    def _():
        acc_ref[...] = jnp.zeros_like(acc_ref)

    acc_ref[...] += jnp.dot(a_ref[...], h_ref[pl.ds(koff, tk), :],
                            preferred_element_type=jnp.float32)

    @pl.when(k == pl.num_programs(1) - 1)
    def _():
        r = acc_ref[...] + b_ref[...]          # (tm, Hp) + (1, Hp) broadcast
        if apply_relu:
            r = jnp.maximum(r, 0.0)
        o_ref[...] = r.astype(o_ref.dtype)


def gcn_conv_fused(adj_p, x_p, w, b, *, relu, tm=_TM, tk=_TK):
    """One GCNConv layer on padded inputs.

    adj_p: (Np, Np) padded normalized adjacency (f32)
    x_p:   (Np, Fp) padded node features, Fp multiple of 128 (f32)
    w, b:  unpadded (F, H) weight / (H,) bias -> zero-padded here
    returns (Np, Hp) float32, still padded / lane dense.
    """
    Np = adj_p.shape[0]
    Fp = x_p.shape[1]
    tm = min(tm, Np)
    tk = min(tk, Np)
    assert Np % tm == 0 and Np % tk == 0, (Np, tm, tk)

    Hp = _round_up(w.shape[1], _LANE)
    w_p = jnp.zeros((Fp, Hp), jnp.float32).at[: w.shape[0], : w.shape[1]].set(w)
    b_p = jnp.zeros((1, Hp), jnp.float32).at[0, : b.shape[0]].set(b)

    # bf16 MXU operands, f32 accumulation.
    a_b = adj_p.astype(jnp.bfloat16)
    x_b = x_p.astype(jnp.bfloat16)
    w_b = w_p.astype(jnp.bfloat16)

    grid = (Np // tm, Np // tk)
    kernel = functools.partial(_gcn_layer_kernel, tk=tk, apply_relu=relu)

    flops = 2 * Np * Fp * Hp + 2 * Np * Np * Hp
    bytes_accessed = (a_b.size * 2 + x_b.size * 2 + w_b.size * 2
                      + b_p.size * 4 + Np * Hp * 4)

    return pl.pallas_call(
        kernel,
        out_shape=jax.ShapeDtypeStruct((Np, Hp), jnp.float32),
        grid_spec=pltpu.PrefetchScalarGridSpec(
            num_scalar_prefetch=0,
            grid=grid,
            in_specs=[
                pl.BlockSpec((tm, tk), lambda i, k: (i, k)),   # A_hat tile
                pl.BlockSpec((Np, Fp), lambda i, k: (0, 0)),   # X (resident, 1 DMA)
                pl.BlockSpec((Fp, Hp), lambda i, k: (0, 0)),   # W (resident)
                pl.BlockSpec((1, Hp), lambda i, k: (0, 0)),    # bias
            ],
            out_specs=pl.BlockSpec((tm, Hp), lambda i, k: (i, 0)),
            scratch_shapes=[
                pltpu.VMEM((Np, Hp), jnp.bfloat16),   # H = X @ W (persistent)
                pltpu.VMEM((tm, Hp), jnp.float32),    # f32 accumulator
            ],
        ),
        compiler_params=pltpu.CompilerParams(
            # i must stay sequential: i > 0 reuses the H scratch filled at i == 0.
            # TODO(synk): on v7x megacore a parallel row axis would need per-core
            #             H materialization to split i across the two TensorCores.
            dimension_semantics=("arbitrary", "arbitrary"),
            vmem_limit_bytes=32 * 1024 * 1024,
        ),
        cost_estimate=pl.CostEstimate(
            flops=flops, transcendentals=0, bytes_accessed=bytes_accessed),
    )(a_b, x_b, w_b, b_p)


# ---------------------------------------------------------------------------
# GCN glue (adjacency normalization / padding in plain JAX, compute in Pallas).
# ---------------------------------------------------------------------------
def build_norm_adj(edge_index, num_nodes):
    """Dense D^{-1/2}(A + I)D^{-1/2} from a [2, E] edge_index (src, dst)."""
    src, dst = edge_index[0], edge_index[1]
    adj = jnp.zeros((num_nodes, num_nodes), jnp.float32).at[dst, src].set(1.0)
    adj = adj + jnp.eye(num_nodes, dtype=jnp.float32)  # add self-loops
    deg = adj.sum(axis=1)
    d_inv_sqrt = jnp.where(deg > 0, 1.0 / jnp.sqrt(deg), 0.0)
    return d_inv_sqrt[:, None] * adj * d_inv_sqrt[None, :]


def gcn_forward(x, adj_norm, params):
    (w1, b1), (w2, b2) = params
    n, f = x.shape
    num_classes = w2.shape[1]

    # Pad node axis so both tile sizes divide it; feature axis to 128 lanes.
    np_ = _round_up(n, max(_TM, _TK))
    fp_ = _round_up(f, _LANE)
    adj_p = jnp.zeros((np_, np_), jnp.float32).at[:n, :n].set(adj_norm)
    x_p = jnp.zeros((np_, fp_), jnp.float32).at[:n, :f].set(x)

    h = gcn_conv_fused(adj_p, x_p, w1, b1, relu=True)      # (Np, 128), padded
    # F.dropout(p=0.5, training=False) -> identity
    out_p = gcn_conv_fused(adj_p, h, w2, b2, relu=False)   # (Np, 128), padded
    return out_p[:n, :num_classes]


# ---------------------------------------------------------------------------
if __name__ == "__main__":
    # Small synthetic stand-in for Cora (real: 2708 nodes, 1433 feats, 7 classes).
    N_NODES = 200
    NUM_FEATURES = 96
    HIDDEN = 64
    NUM_CLASSES = 7
    N_EDGES = 800

    key = jax.random.PRNGKey(0)
    kx, ke, kw1, kb1, kw2, kb2 = jax.random.split(key, 6)

    x = jax.random.normal(kx, (N_NODES, NUM_FEATURES), jnp.float32)
    edge_index = jax.random.randint(ke, (2, N_EDGES), 0, N_NODES)

    def glorot(k, shape):
        lim = jnp.sqrt(6.0 / (shape[0] + shape[1]))
        return jax.random.uniform(k, shape, jnp.float32, -lim, lim)

    w1 = glorot(kw1, (NUM_FEATURES, HIDDEN))
    b1 = 0.01 * jax.random.normal(kb1, (HIDDEN,), jnp.float32)
    w2 = glorot(kw2, (HIDDEN, NUM_CLASSES))
    b2 = 0.01 * jax.random.normal(kb2, (NUM_CLASSES,), jnp.float32)
    params = ((w1, b1), (w2, b2))

    adj_norm = build_norm_adj(edge_index, N_NODES)

    out = gcn_forward(x, adj_norm, params)
    out = jax.block_until_ready(out)
    assert out.shape == (N_NODES, NUM_CLASSES), out.shape

    # Pure-JAX reference mirroring the kernel's bf16-operand / f32-accum math.
    def bf(a):
        return a.astype(jnp.bfloat16).astype(jnp.float32)

    a_r = bf(adj_norm)
    h1 = bf(bf(x) @ bf(w1))
    l1 = jnp.maximum(a_r @ h1 + b1, 0.0)
    h2 = bf(bf(l1) @ bf(w2))
    ref = a_r @ h2 + b2

    assert jnp.allclose(out, ref, atol=5e-2, rtol=5e-2), (
        "Pallas vs reference mismatch, max abs err = "
        f"{float(jnp.max(jnp.abs(out - ref)))}")

    print("KERNEL_OK")
</pallas_src>

<mosaic_0001>
module attributes {stable_mosaic.version = 11 : i64} {
  func.func @_gcn_layer_kernel(%arg0: i32, %arg1: i32, %arg2: memref<256x512xbf16, #tpu.memory_space<vmem>>, %arg3: memref<512x128xbf16, #tpu.memory_space<vmem>>, %arg4: memref<128x128xbf16, #tpu.memory_space<vmem>>, %arg5: memref<1x128xf32, #tpu.memory_space<vmem>>, %arg6: memref<256x128xf32, #tpu.memory_space<vmem>>, %arg7: memref<512x128xbf16, #tpu.memory_space<vmem>>, %arg8: memref<256x128xf32, #tpu.memory_space<vmem>>) attributes {dimension_semantics = [#tpu.dimension_semantics<arbitrary>, #tpu.dimension_semantics<arbitrary>], iteration_bounds = array<i64: 2, 1>, scalar_prefetch = 0 : i64, scratch_operands = 2 : i64, tpu.core_type = #tpu.core_type<tc>, window_params = [{transform_indices = @transform_0, window_bounds = array<i64: 256, 512>}, {pipeline_mode = #tpu.pipeline_mode<synchronous>, transform_indices = @transform_1, window_bounds = array<i64: 512, 128>}, {pipeline_mode = #tpu.pipeline_mode<synchronous>, transform_indices = @transform_2, window_bounds = array<i64: 128, 128>}, {pipeline_mode = #tpu.pipeline_mode<synchronous>, transform_indices = @transform_3, window_bounds = array<i64: 1, 128>}, {transform_indices = @transform_4, window_bounds = array<i64: 256, 128>}]} {
    %c512_i32 = arith.constant 512 : i32
    %0 = arith.muli %arg1, %c512_i32 : i32
    %1 = tpu.assume_multiple %0, 512 : i32
    %c0_i32 = arith.constant 0 : i32
    %2 = arith.cmpi eq, %arg0, %c0_i32 : i32
    %3 = arith.extui %2 : i1 to i32
    %c0_i32_0 = arith.constant 0 : i32
    %4 = arith.cmpi ne, %3, %c0_i32_0 : i32
    scf.if %4 {
      %18 = arith.index_cast %1 : i32 to index
      %c0_11 = arith.constant 0 : index
      %19 = vector.load %arg3[%18, %c0_11] : memref<512x128xbf16, #tpu.memory_space<vmem>>, vector<512x128xbf16>
      %c0_12 = arith.constant 0 : index
      %c0_13 = arith.constant 0 : index
      %20 = vector.load %arg4[%c0_12, %c0_13] : memref<128x128xbf16, #tpu.memory_space<vmem>>, vector<128x128xbf16>
      %cst_14 = arith.constant dense<0.000000e+00> : vector<512x128xf32>
      %21 = tpu.matmul %19, %20, %cst_14 {dimension_numbers = #tpu.dot_dimension_numbers<[1], [0], [0], [1], [0, 0, 1, 1], [], []>} : vector<512x128xbf16>, vector<128x128xbf16>, vector<512x128xf32> -> vector<512x128xf32>
      %22 = arith.truncf %21 : vector<512x128xf32> to vector<512x128xbf16>
      %23 = arith.index_cast %1 : i32 to index
      %c0_15 = arith.constant 0 : index
      %24 = vector.load %arg7[%23, %c0_15] : memref<512x128xbf16, #tpu.memory_space<vmem>>, vector<512x128xbf16>
      tpu.vector_store %arg7[%23, %c0_15], %22 {strides = array<i32>} : memref<512x128xbf16, #tpu.memory_space<vmem>>, vector<512x128xbf16>,
    } else {
    }
    %c0_i32_1 = arith.constant 0 : i32
    %5 = arith.cmpi eq, %arg1, %c0_i32_1 : i32
    %6 = arith.extui %5 : i1 to i32
    %c0_i32_2 = arith.constant 0 : i32
    %7 = arith.cmpi ne, %6, %c0_i32_2 : i32
    scf.if %7 {
      %cst_11 = arith.constant 0.000000e+00 : f32
      %18 = vector.broadcast %cst_11 : f32 to vector<256x128xf32>
      %c0_12 = arith.constant 0 : index
      %c0_13 = arith.constant 0 : index
      %19 = vector.load %arg8[%c0_12, %c0_13] : memref<256x128xf32, #tpu.memory_space<vmem>>, vector<256x128xf32>
      tpu.vector_store %arg8[%c0_12, %c0_13], %18 {strides = array<i32>} : memref<256x128xf32, #tpu.memory_space<vmem>>, vector<256x128xf32>,
    } else {
    }
    %c0 = arith.constant 0 : index
    %c0_3 = arith.constant 0 : index
    %8 = vector.load %arg8[%c0, %c0_3] : memref<256x128xf32, #tpu.memory_space<vmem>>, vector<256x128xf32>
    %c0_4 = arith.constant 0 : index
    %c0_5 = arith.constant 0 : index
    %9 = vector.load %arg2[%c0_4, %c0_5] : memref<256x512xbf16, #tpu.memory_space<vmem>>, vector<256x512xbf16>
    %10 = arith.index_cast %1 : i32 to index
    %c0_6 = arith.constant 0 : index
    %11 = vector.load %arg7[%10, %c0_6] : memref<512x128xbf16, #tpu.memory_space<vmem>>, vector<512x128xbf16>
    %cst = arith.constant dense<0.000000e+00> : vector<256x128xf32>
    %12 = tpu.matmul %9, %11, %cst {dimension_numbers = #tpu.dot_dimension_numbers<[1], [0], [0], [1], [0, 0, 1, 1], [], []>} : vector<256x512xbf16>, vector<512x128xbf16>, vector<256x128xf32> -> vector<256x128xf32>
    %13 = arith.addf %8, %12 : vector<256x128xf32>
    %c0_7 = arith.constant 0 : index
    %c0_8 = arith.constant 0 : index
    %14 = vector.load %arg8[%c0_7, %c0_8] : memref<256x128xf32, #tpu.memory_space<vmem>>, vector<256x128xf32>
    tpu.vector_store %arg8[%c0_7, %c0_8], %13 {strides = array<i32>} : memref<256x128xf32, #tpu.memory_space<vmem>>, vector<256x128xf32>,
    %c0_i32_9 = arith.constant 0 : i32
    %15 = arith.cmpi eq, %arg1, %c0_i32_9 : i32
    %16 = arith.extui %15 : i1 to i32
    %c0_i32_10 = arith.constant 0 : i32
    %17 = arith.cmpi ne, %16, %c0_i32_10 : i32
    scf.if %17 {
      %c0_11 = arith.constant 0 : index
      %c0_12 = arith.constant 0 : index
      %18 = vector.load %arg8[%c0_11, %c0_12] : memref<256x128xf32, #tpu.memory_space<vmem>>, vector<256x128xf32>
      %c0_13 = arith.constant 0 : index
      %c0_14 = arith.constant 0 : index
      %19 = vector.load %arg5[%c0_13, %c0_14] : memref<1x128xf32, #tpu.memory_space<vmem>>, vector<1x128xf32>
      %20 = vector.broadcast %19 : vector<1x128xf32> to vector<256x128xf32>
      %21 = arith.addf %18, %20 : vector<256x128xf32>
      %cst_15 = arith.constant 0.000000e+00 : f32
      %22 = vector.broadcast %cst_15 : f32 to vector<256x128xf32>
      %23 = arith.maximumf %21, %22 : vector<256x128xf32>
      %c0_16 = arith.constant 0 : index
      %c0_17 = arith.constant 0 : index
      %24 = vector.load %arg6[%c0_16, %c0_17] : memref<256x128xf32, #tpu.memory_space<vmem>>, vector<256x128xf32>
      tpu.vector_store %arg6[%c0_16, %c0_17], %23 {strides = array<i32>} : memref<256x128xf32, #tpu.memory_space<vmem>>, vector<256x128xf32>,
    } else {
    }
    return
  }
  func.func @transform_0(%arg0: i32, %arg1: i32) -> (i32, i32) {
    %c0_i32 = arith.constant 0 : i32
    return %arg0, %arg1 : i32, i32
  }
  func.func @transform_1(%arg0: i32, %arg1: i32) -> (i32, i32) {
    %c0_i32 = arith.constant 0 : i32
    %c0_i32_0 = arith.constant 0 : i32
    %c0_i32_1 = arith.constant 0 : i32
    return %c0_i32, %c0_i32_0 : i32, i32
  }
  func.func @transform_2(%arg0: i32, %arg1: i32) -> (i32, i32) {
    %c0_i32 = arith.constant 0 : i32
    %c0_i32_0 = arith.constant 0 : i32
    %c0_i32_1 = arith.constant 0 : i32
    return %c0_i32, %c0_i32_0 : i32, i32
  }
  func.func @transform_3(%arg0: i32, %arg1: i32) -> (i32, i32) {
    %c0_i32 = arith.constant 0 : i32
    %c0_i32_0 = arith.constant 0 : i32
    %c0_i32_1 = arith.constant 0 : i32
    return %c0_i32, %c0_i32_0 : i32, i32
  }
  func.func @transform_4(%arg0: i32, %arg1: i32) -> (i32, i32) {
    %c0_i32 = arith.constant 0 : i32
    %c0_i32_0 = arith.constant 0 : i32
    return %arg0, %c0_i32 : i32, i32
  }
}

</mosaic_0001>

<llo_original>
// kernel: tpu_custom_call.1
$region0: #{tpu_custom_call.1}
  #allocation0 [shape = 'u32[]', space=smem, size = 0x4, offset = 0x4, fixed_abs, tag = 'smem constant byte address 0x4 - core index']
  #allocation1 [shape = 'u32[72,128]{1,0:T(1,128)}', space=vmem, size = 0x9000, scoped, tag = 'internal scratch']
  #allocation2 [shape = 'bf16[512,128]{1,0:T(8,128)(2,1)}', space=vmem, size = 0x20000, scoped, tag = 'scratch operand']
  #allocation3 [shape = 'f32[256,128]{1,0:T(8,128)}', space=vmem, size = 0x20000, scoped, tag = 'scratch operand']
  %s0 = inlined_call_operand.hbm [shape: bf16[512,512], index: 0, kind: input, shape index: {}]
  %s1 = inlined_call_operand.hbm [shape: bf16[512,128], index: 1, kind: input, shape index: {}]
  %s2 = inlined_call_operand.hbm [shape: bf16[128,128], index: 2, kind: input, shape index: {}]
  %s3 = inlined_call_operand.vmem [shape: f32[1,128], index: 3, kind: input, shape index: {}]
  %s4 = inlined_call_operand.hbm [shape: f32[512,128], index: 4, kind: output, shape index: {}]
  %s5 = sld [smem:[#allocation0]]
  $region73: #{tpu_custom_call.1} parent=0
    _
  %s7 = ssub.s32 1, %s5
  %s8 = scalar_select 0, %s7, %s5
  $region1: #{tpu_custom_call.1} parent=0
    #allocation4 [shape = 'u8[524288]{0}', space=vmem, size = 0x80000, scoped, tag = 'input window, operand 0']
    #allocation5 [shape = 's32[2]{0}', space=sflag, size = 0x8, scoped, tag = 'scoped memory for tpu_custom_call.1']
    #allocation6 [shape = 's32[2]{0}', space=sflag, size = 0x8, scoped, tag = 'scoped memory for tpu_custom_call.1']
    #allocation7 [shape = 'u8[131072]{0}', space=vmem, size = 0x20000, scoped, tag = 'input window, operand 1, single buffered']
    #allocation8 [shape = 's32[1]{0}', space=sflag, size = 0x4, scoped, tag = 'scoped memory for tpu_custom_call.1']
    #allocation9 [shape = 'u8[32768]{0}', space=vmem, size = 0x8000, scoped, tag = 'input window, operand 2, single buffered']
    #allocation10 [shape = 'u8[262144]{0}', space=vmem, size = 0x40000, scoped, tag = 'output window, operand 0']
    %9 = vsyncpa [#allocation5], 0
    %s10 = scalar_lea.sflag [#allocation5], 1
    %11 = vsyncpa %s10, 0
    %12 = vsyncpa [#allocation8], 0
    %13 = vsyncpa [#allocation6], 0
    %s14 = scalar_lea.sflag [#allocation6], 1
    %15 = vsyncpa %s14, 0
    loop: start=0, step=1, limit=4
    $region2: #{tpu_custom_call.1} parent=1 // loop_pre_header
      _
    $region3: #{tpu_custom_call.1} parent=1 // loop_header
      %s17 = sphi 0, %s21
      %p18 = scmp.ge.s32.totalorder %s17, 4
      %s24 = sphi 0, %s36
      %s25 = sphi 0, %s32
      %s26 = sphi 0, %s24
      %s27 = sphi 0, %s25
      %s28 = sphi 0, %s26
      %s29 = sphi 0, %s27
      %s41 = sphi 0, %s43
      %s44 = sphi 0, %s41
      %s45 = sphi 0, %s44
      %s61 = sphi 0, %s45
      %s65 = sphi 0, %s65
      %s67 = sphi 0, %s65
      %s68 = sphi 0, %s67
      %s82 = sphi 0, %s68
      %s86 = sphi 0, %s86
      %s88 = sphi 0, %s86
      %s89 = sphi 0, %s88
      %s103 = sphi 0, %s89
      %s107 = sphi 0, %s107
      %s109 = sphi 0, %s107
      %s110 = sphi 0, %s109
      %s124 = sphi 0, %s110
      %s130 = sphi 0, %s132
      %s133 = sphi 0, %s130
      %s134 = sphi 0, %s133
      %s150 = sphi 0, %s134
    $region4: #{tpu_custom_call.1} parent=1 // loop_header_branch
      %20 = sbr.rel (%p18) target = $region8
    $region5: #{tpu_custom_call.1} parent=1 // loop_body
      %s22 = ssub.s32 %s17, 1
      %s23 = ssub.s32 %s17, 2
      %s30 = sadd.s32 1, %s25
      %p31 = scmp.ge.s32.totalorder %s30, 1
      %s32 = scalar_select %p31, 0, %s30
      %s33 = sadd.s32 1, %s24
      %s34 = scalar_select %p31, %s33, %s24
      %p35 = scmp.ge.s32.totalorder %s34, 2
      %s36 = scalar_select %p35, 0, %s34
      %s37 = ssub.s32 %s24, %s36
      %s38 = ssub.s32 %s25, %s32
      %s39 = sor.u32 %s37, %s38
      %p40 = scmp.eq.s32.totalorder %s39, 0
      %s42 = sadd.s32 %s41, 1
      %s43 = scalar_select %p40, %s41, %s42
      %p46 = pneg %p40
      %p47 = scmp.eq.s32.totalorder %s17, 1
      %p48 = por %p46, %p47
      %p49 = scmp.ne.s32.totalorder %s41, %s44
      %p50 = scmp.eq.s32.totalorder %s17, 0
      %p51 = por %p49, %p50
      %p52 = scmp.ne.s32.totalorder %s41, %s44
      %p53 = scmp.eq.s32.totalorder %s22, 1
      %p54 = por %p52, %p53
      %p55 = scmp.ne.s32.totalorder %s44, %s45
      %p56 = scmp.eq.s32.totalorder %s22, 0
      %p57 = por %p55, %p56
      %p58 = scmp.ne.s32.totalorder %s44, %s45
      %p59 = scmp.eq.s32.totalorder %s23, 1
      %p60 = por %p58, %p59
      %p62 = scmp.ne.s32.totalorder %s45, %s61
      %p63 = scmp.eq.s32.totalorder %s23, 0
      %p64 = por %p62, %p63
      %s66 = sadd.s32 %s65, 1
      %p69 = scmp.eq.s32.totalorder %s17, 1
      %p70 = scmp.ne.s32.totalorder %s65, %s67
      %p71 = scmp.eq.s32.totalorder %s17, 0
      %p72 = por %p70, %p71
      %p73 = scmp.ne.s32.totalorder %s65, %s67
      %p74 = scmp.eq.s32.totalorder %s22, 1
      %p75 = por %p73, %p74
      %p76 = scmp.ne.s32.totalorder %s67, %s68
      %p77 = scmp.eq.s32.totalorder %s22, 0
      %p78 = por %p76, %p77
      %p79 = scmp.ne.s32.totalorder %s67, %s68
      %p80 = scmp.eq.s32.totalorder %s23, 1
      %p81 = por %p79, %p80
      %p83 = scmp.ne.s32.totalorder %s68, %s82
      %p84 = scmp.eq.s32.totalorder %s23, 0
      %p85 = por %p83, %p84
      %s87 = sadd.s32 %s86, 1
      %p90 = scmp.eq.s32.totalorder %s17, 1
      %p91 = scmp.ne.s32.totalorder %s86, %s88
      %p92 = scmp.eq.s32.totalorder %s17, 0
      %p93 = por %p91, %p92
      %p94 = scmp.ne.s32.totalorder %s86, %s88
      %p95 = scmp.eq.s32.totalorder %s22, 1
      %p96 = por %p94, %p95
      %p97 = scmp.ne.s32.totalorder %s88, %s89
      %p98 = scmp.eq.s32.totalorder %s22, 0
      %p99 = por %p97, %p98
      %p100 = scmp.ne.s32.totalorder %s88, %s89
      %p101 = scmp.eq.s32.totalorder %s23, 1
      %p102 = por %p100, %p101
      %p104 = scmp.ne.s32.totalorder %s89, %s103
      %p105 = scmp.eq.s32.totalorder %s23, 0
      %p106 = por %p104, %p105
      %s108 = sadd.s32 %s107, 1
      %p111 = scmp.eq.s32.totalorder %s17, 1
      %p112 = scmp.ne.s32.totalorder %s107, %s109
      %p113 = scmp.eq.s32.totalorder %s17, 0
      %p114 = por %p112, %p113
      %p115 = scmp.ne.s32.totalorder %s107, %s109
      %p116 = scmp.eq.s32.totalorder %s22, 1
      %p117 = por %p115, %p116
      %p118 = scmp.ne.s32.totalorder %s109, %s110
      %p119 = scmp.eq.s32.totalorder %s22, 0
      %p120 = por %p118, %p119
      %p121 = scmp.ne.s32.totalorder %s109, %s110
      %p122 = scmp.eq.s32.totalorder %s23, 1
      %p123 = por %p121, %p122
      %p125 = scmp.ne.s32.totalorder %s110, %s124
      %p126 = scmp.eq.s32.totalorder %s23, 0
      %p127 = por %p125, %p126
      %s128 = ssub.s32 %s24, %s36
      %p129 = scmp.eq.s32.totalorder %s128, 0
      %s131 = sadd.s32 %s130, 1
      %s132 = scalar_select %p129, %s130, %s131
      %p135 = pneg %p129
      %p136 = scmp.eq.s32.totalorder %s17, 1
      %p137 = por %p135, %p136
      %p138 = scmp.ne.s32.totalorder %s130, %s133
      %p139 = scmp.eq.s32.totalorder %s17, 0
      %p140 = por %p138, %p139
      %p141 = scmp.ne.s32.totalorder %s130, %s133
      %p142 = scmp.eq.s32.totalorder %s22, 1
      %p143 = por %p141, %p142
      %p144 = scmp.ne.s32.totalorder %s133, %s134
      %p145 = scmp.eq.s32.totalorder %s22, 0
      %p146 = por %p144, %p145
      %p147 = scmp.ne.s32.totalorder %s133, %s134
      %p148 = scmp.eq.s32.totalorder %s23, 1
      %p149 = por %p147, %p148
      %p151 = scmp.ne.s32.totalorder %s134, %s150
      %p152 = scmp.eq.s32.totalorder %s23, 0
      %p153 = por %p151, %p152
      %p154 = scmp.le.s32.totalorder 1, %s17
      %p155 = scmp.lt.s32.totalorder %s17, 3
      %p156 = pnand %p154, %p155
      %p157 = pneg %p156
      // Predicated region
      $region9: #{tpu_custom_call.1} parent=5 // pred_check
        _
      $region10: #{tpu_custom_call.1} parent=5 // pred_check_branch
        %159 = sbr.rel (%p156) target = $region12
      $region11: #{tpu_custom_call.1} parent=5 // pred_region
        %s160 = ssub.s32 %s17, 1
        // Predicated region
        $region13: #{tpu_custom_call.1} parent=11 // pred_check
          %p161 = pneg %p78
        $region14: #{tpu_custom_call.1} parent=11 // pred_check_branch
          %163 = sbr.rel (%p161) target = $region16
        $region15: #{tpu_custom_call.1} parent=11 // pred_region
          %165 = vsyncadd [#allocation8], 0
          %s166 = sshll.u32 %s1, 4
          %s167 = int_to_ptr.hbm [resolvable:$true] %s166
          %s168 = sshll.u32 [#allocation7], 4
          %s169 = int_to_ptr.vmem [resolvable:$true] %s168
          %174 = dma.hbm_to_vmem [thread:$0]  %s167, 4096, %s169, [#allocation8], 64, 64, 4
        $region16: #{tpu_custom_call.1} parent=11 // pred_fallthru
          _
        // Predicated region
        $region17: #{tpu_custom_call.1} parent=11 // pred_check
          %p175 = pneg %p99
        $region18: #{tpu_custom_call.1} parent=11 // pred_check_branch
          %177 = sbr.rel (%p175) target = $region20
        $region19: #{tpu_custom_call.1} parent=11 // pred_region
          %179 = vsyncadd [#allocation8], 0
          %s180 = sshll.u32 %s2, 4
          %s181 = int_to_ptr.hbm [resolvable:$true] %s180
          %s182 = sshll.u32 [#allocation9], 4
          %s183 = int_to_ptr.vmem [resolvable:$true] %s182
          %188 = dma.hbm_to_vmem [thread:$0]  %s181, 1024, %s183, [#allocation8], 64, 64, 4
        $region20: #{tpu_custom_call.1} parent=11 // pred_fallthru
          _
        // Predicated region
        $region21: #{tpu_custom_call.1} parent=11 // pred_check
          %p189 = pneg %p120
        $region22: #{tpu_custom_call.1} parent=11 // pred_check_branch
          %191 = sbr.rel (%p189) target = $region24
        $region23: #{tpu_custom_call.1} parent=11 // pred_region
          _
        $region24: #{tpu_custom_call.1} parent=11 // pred_fallthru
          _
      $region12: #{tpu_custom_call.1} parent=5 // pred_fallthru
        _
      %p192 = scmp.lt.s32.totalorder %s17, 2
      // Predicated region
      $region25: #{tpu_custom_call.1} parent=5 // pred_check
        %p193 = pneg %p192
      $region26: #{tpu_custom_call.1} parent=5 // pred_check_branch
        %195 = sbr.rel (%p193) target = $region28
      $region27: #{tpu_custom_call.1} parent=5 // pred_region
        // Predicated region
        $region29: #{tpu_custom_call.1} parent=27 // pred_check
          %p196 = pneg %p51
        $region30: #{tpu_custom_call.1} parent=27 // pred_check_branch
          %198 = sbr.rel (%p196) target = $region32
        $region31: #{tpu_custom_call.1} parent=27 // pred_region
          %s199 = sand.u32 %s41, 1
          %s200 = scalar_lea.sflag [#allocation5], %s199
          %s201 = sand.u32 %s41, 1
          %s202 = smul.addr %s201, 512
          %s203 = scalar_lea.vmem [#allocation4], %s202
          %s204 = smul.u32 32, %s24
          %s205 = smul.u32 4, %s25
          %207 = vsyncadd %s200, 0
          %s208 = smul.addr %s204, 4
          %s209 = sadd.s32 %s205, %s208
          %s210 = smul.addr %s209, 4
          %s211 = scalar_lea.hbm %s0, %s210
          %s212 = sshll.u32 %s211, 4
          %s213 = int_to_ptr.hbm [resolvable:$true] %s212
          %s214 = sshll.u32 %s203, 4
          %s215 = int_to_ptr.vmem [resolvable:$true] %s214
          %220 = dma.hbm_to_vmem [thread:$0]  %s213, 8192, %s215, %s200, 256, 256, 16
        $region32: #{tpu_custom_call.1} parent=27 // pred_fallthru
          _
      $region28: #{tpu_custom_call.1} parent=5 // pred_fallthru
        _
      %p221 = scmp.le.s32.totalorder 1, %s17
      %p222 = scmp.lt.s32.totalorder %s17, 3
      %p223 = pnand %p221, %p222
      %p224 = pneg %p223
      // Predicated region
      $region33: #{tpu_custom_call.1} parent=5 // pred_check
        _
      $region34: #{tpu_custom_call.1} parent=5 // pred_check_branch
        %226 = sbr.rel (%p223) target = $region36
      $region35: #{tpu_custom_call.1} parent=5 // pred_region
        %s227 = ssub.s32 %s17, 1
        %s228 = sand.u32 %s44, 1
        %s229 = scalar_lea.sflag [#allocation5], %s228
        %s230 = sand.u32 %s44, 1
        %s231 = smul.addr %s230, 512
        %s232 = scalar_lea.vmem [#allocation4], %s231
        // Predicated region
        $region37: #{tpu_custom_call.1} parent=35 // pred_check
          %p233 = pneg %p57
        $region38: #{tpu_custom_call.1} parent=35 // pred_check_branch
          %235 = sbr.rel (%p233) target = $region40
        $region39: #{tpu_custom_call.1} parent=35 // pred_region
          %237 = dma.done %s229, 8192
        $region40: #{tpu_custom_call.1} parent=35 // pred_fallthru
          _
        // Predicated region
        $region41: #{tpu_custom_call.1} parent=35 // pred_check
          %p238 = pneg %p78
        $region42: #{tpu_custom_call.1} parent=35 // pred_check_branch
          %240 = sbr.rel (%p238) target = $region44
        $region43: #{tpu_custom_call.1} parent=35 // pred_region
          %242 = dma.done [#allocation8], 4096
        $region44: #{tpu_custom_call.1} parent=35 // pred_fallthru
          _
        // Predicated region
        $region45: #{tpu_custom_call.1} parent=35 // pred_check
          %p243 = pneg %p99
        $region46: #{tpu_custom_call.1} parent=35 // pred_check_branch
          %245 = sbr.rel (%p243) target = $region48
        $region47: #{tpu_custom_call.1} parent=35 // pred_region
          %247 = dma.done [#allocation8], 1024
        $region48: #{tpu_custom_call.1} parent=35 // pred_fallthru
          _
        %s248 = sand.u32 %s44, 1
        %s249 = scalar_lea.sflag [#allocation5], %s248
        %s250 = sand.u32 %s44, 1
        %s251 = smul.addr %s250, 512
        %s252 = scalar_lea.vmem [#allocation4], %s251
        %p253 = pneg %p57
        %p254 = pneg %p54
        %p255 = pneg %p78
        %p256 = pneg %p75
        %p257 = pneg %p99
        %p258 = pneg %p96
        %p259 = pneg %p120
        %p260 = pneg %p117
        %p261 = pneg %p146
        %p262 = pneg %p143
        %s263 = sand.u32 %s133, 1
        %s264 = scalar_lea.sflag [#allocation6], %s263
        %s265 = sand.u32 %s133, 1
        %s266 = smul.addr %s265, 256
        %s267 = scalar_lea.vmem [#allocation10], %s266
        %s268 = smul.u32 32, %s26
        %s269 = smul.u32 4, %s27
        %s270 = smul.u32 32, %s26
        %s271 = smul.u32 %s27, 512
        %p272 = scmp.eq.s32.totalorder %s26, 0
        // Predicated region
        $region49: #{tpu_custom_call.1} parent=35 // pred_check
          %p273 = pneg %p272
        $region50: #{tpu_custom_call.1} parent=35 // pred_check_branch
          %275 = sbr.rel (%p273) target = $region52
        $region51: #{tpu_custom_call.1} parent=35 // pred_region
          %s276 = sshra.s32 %s271, 3
          %s277 = sand.u32 %s271, 7
          %s278 = smul.addr %s276, 4
          %s279 = scalar_lea.vmem [#allocation7], %s278
          %v280 = vld [vmem:[%s279] sm:$0xf]
          %v281 = vld [vmem:[%s279 + $0x4] sm:$0xf]
          %v282 = vld [vmem:[%s279 + $0x8] sm:$0xf]
          %v283 = vld [vmem:[%s279 + $0xc] sm:$0xf]
          %v284 = vld [vmem:[%s279 + $0x10] sm:$0xf]
          %v285 = vld [vmem:[%s279 + $0x14] sm:$0xf]
          %v286 = vld [vmem:[%s279 + $0x18] sm:$0xf]
          %v287 = vld [vmem:[%s279 + $0x1c] sm:$0xf]
          %v288 = vld [vmem:[%s279 + $0x20] sm:$0xf]
          %v289 = vld [vmem:[%s279 + $0x24] sm:$0xf]
          %v290 = vld [vmem:[%s279 + $0x28] sm:$0xf]
          %v291 = vld [vmem:[%s279 + $0x2c] sm:$0xf]
          %v292 = vld [vmem:[%s279 + $0x30] sm:$0xf]
          %v293 = vld [vmem:[%s279 + $0x34] sm:$0xf]
          %v294 = vld [vmem:[%s279 + $0x38] sm:$0xf]
          %v295 = vld [vmem:[%s279 + $0x3c] sm:$0xf]
          %v296 = vld [vmem:[%s279 + $0x40] sm:$0xf]
          %v297 = vld [vmem:[%s279 + $0x44] sm:$0xf]
          %v298 = vld [vmem:[%s279 + $0x48] sm:$0xf]
          %v299 = vld [vmem:[%s279 + $0x4c] sm:$0xf]
          %v300 = vld [vmem:[%s279 + $0x50] sm:$0xf]
          %v301 = vld [vmem:[%s279 + $0x54] sm:$0xf]
          %v302 = vld [vmem:[%s279 + $0x58] sm:$0xf]
          %v303 = vld [vmem:[%s279 + $0x5c] sm:$0xf]
          %v304 = vld [vmem:[%s279 + $0x60] sm:$0xf]
          %v305 = vld [vmem:[%s279 + $0x64] sm:$0xf]
          %v306 = vld [vmem:[%s279 + $0x68] sm:$0xf]
          %v307 = vld [vmem:[%s279 + $0x6c] sm:$0xf]
          %v308 = vld [vmem:[%s279 + $0x70] sm:$0xf]
          %v309 = vld [vmem:[%s279 + $0x74] sm:$0xf]
          %v310 = vld [vmem:[%s279 + $0x78] sm:$0xf]
          %v311 = vld [vmem:[%s279 + $0x7c] sm:$0xf]
          %v312 = vld [vmem:[%s279 + $0x80] sm:$0xf]
          %v313 = vld [vmem:[%s279 + $0x84] sm:$0xf]
          %v314 = vld [vmem:[%s279 + $0x88] sm:$0xf]
          %v315 = vld [vmem:[%s279 + $0x8c] sm:$0xf]
          %v316 = vld [vmem:[%s279 + $0x90] sm:$0xf]
          %v317 = vld [vmem:[%s279 + $0x94] sm:$0xf]
          %v318 = vld [vmem:[%s279 + $0x98] sm:$0xf]
          %v319 = vld [vmem:[%s279 + $0x9c] sm:$0xf]
          %v320 = vld [vmem:[%s279 + $0xa0] sm:$0xf]
          %v321 = vld [vmem:[%s279 + $0xa4] sm:$0xf]
          %v322 = vld [vmem:[%s279 + $0xa8] sm:$0xf]
          %v323 = vld [vmem:[%s279 + $0xac] sm:$0xf]
          %v324 = vld [vmem:[%s279 + $0xb0] sm:$0xf]
          %v325 = vld [vmem:[%s279 + $0xb4] sm:$0xf]
          %v326 = vld [vmem:[%s279 + $0xb8] sm:$0xf]
          %v327 = vld [vmem:[%s279 + $0xbc] sm:$0xf]
          %v328 = vld [vmem:[%s279 + $0xc0] sm:$0xf]
          %v329 = vld [vmem:[%s279 + $0xc4] sm:$0xf]
          %v330 = vld [vmem:[%s279 + $0xc8] sm:$0xf]
          %v331 = vld [vmem:[%s279 + $0xcc] sm:$0xf]
          %v332 = vld [vmem:[%s279 + $0xd0] sm:$0xf]
          %v333 = vld [vmem:[%s279 + $0xd4] sm:$0xf]
          %v334 = vld [vmem:[%s279 + $0xd8] sm:$0xf]
          %v335 = vld [vmem:[%s279 + $0xdc] sm:$0xf]
          %v336 = vld [vmem:[%s279 + $0xe0] sm:$0xf]
          %v337 = vld [vmem:[%s279 + $0xe4] sm:$0xf]
          %v338 = vld [vmem:[%s279 + $0xe8] sm:$0xf]
          %v339 = vld [vmem:[%s279 + $0xec] sm:$0xf]
          %v340 = vld [vmem:[%s279 + $0xf0] sm:$0xf]
          %v341 = vld [vmem:[%s279 + $0xf4] sm:$0xf]
          %v342 = vld [vmem:[%s279 + $0xf8] sm:$0xf]
          %v343 = vld [vmem:[%s279 + $0xfc] sm:$0xf]
          %v344 = vld [vmem:[#allocation9] sm:$0xf]
          %v345 = vld [vmem:[#allocation9 + $0x4] sm:$0xf]
          %v346 = vld [vmem:[#allocation9 + $0x8] sm:$0xf]
          %v347 = vld [vmem:[#allocation9 + $0xc] sm:$0xf]
          %v348 = vld [vmem:[#allocation9 + $0x10] sm:$0xf]
          %v349 = vld [vmem:[#allocation9 + $0x14] sm:$0xf]
          %v350 = vld [vmem:[#allocation9 + $0x18] sm:$0xf]
          %v351 = vld [vmem:[#allocation9 + $0x1c] sm:$0xf]
          %v352 = vld [vmem:[#allocation9 + $0x20] sm:$0xf]
          %v353 = vld [vmem:[#allocation9 + $0x24] sm:$0xf]
          %v354 = vld [vmem:[#allocation9 + $0x28] sm:$0xf]
          %v355 = vld [vmem:[#allocation9 + $0x2c] sm:$0xf]
          %v356 = vld [vmem:[#allocation9 + $0x30] sm:$0xf]
          %v357 = vld [vmem:[#allocation9 + $0x34] sm:$0xf]
          %v358 = vld [vmem:[#allocation9 + $0x38] sm:$0xf]
          %v359 = vld [vmem:[#allocation9 + $0x3c] sm:$0xf]
          %v424 = vunpack.c.l.b16 %v280
          %v425 = vunpack.c.l.b16 %v281
          %v426 = vunpack.c.l.b16 %v282
          %v427 = vunpack.c.l.b16 %v283
          %v428 = vunpack.c.l.b16 %v284
          %v429 = vunpack.c.l.b16 %v285
          %v430 = vunpack.c.l.b16 %v286
          %v431 = vunpack.c.l.b16 %v287
          %v432 = vunpack.c.l.b16 %v288
          %v433 = vunpack.c.l.b16 %v289
          %v434 = vunpack.c.l.b16 %v290
          %v435 = vunpack.c.l.b16 %v291
          %v436 = vunpack.c.l.b16 %v292
          %v437 = vunpack.c.l.b16 %v293
          %v438 = vunpack.c.l.b16 %v294
          %v439 = vunpack.c.l.b16 %v295
          %v440 = vunpack.c.l.b16 %v296
          %v441 = vunpack.c.l.b16 %v297
          %v442 = vunpack.c.l.b16 %v298
          %v443 = vunpack.c.l.b16 %v299
          %v444 = vunpack.c.l.b16 %v300
          %v445 = vunpack.c.l.b16 %v301
          %v446 = vunpack.c.l.b16 %v302
          %v447 = vunpack.c.l.b16 %v303
          %v448 = vunpack.c.l.b16 %v304
          %v449 = vunpack.c.l.b16 %v305
          %v450 = vunpack.c.l.b16 %v306
          %v451 = vunpack.c.l.b16 %v307
          %v452 = vunpack.c.l.b16 %v308
          %v453 = vunpack.c.l.b16 %v309
          %v454 = vunpack.c.l.b16 %v310
          %v455 = vunpack.c.l.b16 %v311
          %v456 = vunpack.c.l.b16 %v312
          %v457 = vunpack.c.l.b16 %v313
          %v458 = vunpack.c.l.b16 %v314
          %v459 = vunpack.c.l.b16 %v315
          %v460 = vunpack.c.l.b16 %v316
          %v461 = vunpack.c.l.b16 %v317
          %v462 = vunpack.c.l.b16 %v318
          %v463 = vunpack.c.l.b16 %v319
          %v464 = vunpack.c.l.b16 %v320
          %v465 = vunpack.c.l.b16 %v321
          %v466 = vunpack.c.l.b16 %v322
          %v467 = vunpack.c.l.b16 %v323
          %v468 = vunpack.c.l.b16 %v324
          %v469 = vunpack.c.l.b16 %v325
          %v470 = vunpack.c.l.b16 %v326
          %v471 = vunpack.c.l.b16 %v327
          %v472 = vunpack.c.l.b16 %v328
          %v473 = vunpack.c.l.b16 %v329
          %v474 = vunpack.c.l.b16 %v330
          %v475 = vunpack.c.l.b16 %v331
          %v476 = vunpack.c.l.b16 %v332
          %v477 = vunpack.c.l.b16 %v333
          %v478 = vunpack.c.l.b16 %v334
          %v479 = vunpack.c.l.b16 %v335
          %v480 = vunpack.c.l.b16 %v336
          %v481 = vunpack.c.l.b16 %v337
          %v482 = vunpack.c.l.b16 %v338
          %v483 = vunpack.c.l.b16 %v339
          %v484 = vunpack.c.l.b16 %v340
          %v485 = vunpack.c.l.b16 %v341
          %v486 = vunpack.c.l.b16 %v342
          %v487 = vunpack.c.l.b16 %v343
          %v488 = vpack.c.b16 %v425, %v424
          %v489 = vpack.c.b16 %v427, %v426
          %v490 = vpack.c.b16 %v429, %v428
          %v491 = vpack.c.b16 %v431, %v430
          %v492 = vpack.c.b16 %v433, %v432
          %v493 = vpack.c.b16 %v435, %v434
          %v494 = vpack.c.b16 %v437, %v436
          %v495 = vpack.c.b16 %v439, %v438
          %v496 = vpack.c.b16 %v441, %v440
          %v497 = vpack.c.b16 %v443, %v442
          %v498 = vpack.c.b16 %v445, %v444
          %v499 = vpack.c.b16 %v447, %v446
          %v500 = vpack.c.b16 %v449, %v448
          %v501 = vpack.c.b16 %v451, %v450
          %v502 = vpack.c.b16 %v453, %v452
          %v503 = vpack.c.b16 %v455, %v454
          %v504 = vpack.c.b16 %v457, %v456
          %v505 = vpack.c.b16 %v459, %v458
          %v506 = vpack.c.b16 %v461, %v460
          %v507 = vpack.c.b16 %v463, %v462
          %v508 = vpack.c.b16 %v465, %v464
          %v509 = vpack.c.b16 %v467, %v466
          %v510 = vpack.c.b16 %v469, %v468
          %v511 = vpack.c.b16 %v471, %v470
          %v512 = vpack.c.b16 %v473, %v472
          %v513 = vpack.c.b16 %v475, %v474
          %v514 = vpack.c.b16 %v477, %v476
          %v515 = vpack.c.b16 %v479, %v478
          %v516 = vpack.c.b16 %v481, %v480
          %v517 = vpack.c.b16 %v483, %v482
          %v518 = vpack.c.b16 %v485, %v484
          %v519 = vpack.c.b16 %v487, %v486
          %v568 = vunpack.c.l.b16 %v344
          %v569 = vunpack.c.l.b16 %v345
          %v570 = vunpack.c.l.b16 %v346
          %v571 = vunpack.c.l.b16 %v347
          %v572 = vunpack.c.l.b16 %v348
          %v573 = vunpack.c.l.b16 %v349
          %v574 = vunpack.c.l.b16 %v350
          %v575 = vunpack.c.l.b16 %v351
          %v576 = vunpack.c.l.b16 %v352
          %v577 = vunpack.c.l.b16 %v353
          %v578 = vunpack.c.l.b16 %v354
          %v579 = vunpack.c.l.b16 %v355
          %v580 = vunpack.c.l.b16 %v356
          %v581 = vunpack.c.l.b16 %v357
          %v582 = vunpack.c.l.b16 %v358
          %v583 = vunpack.c.l.b16 %v359
          %v584 = vpack.c.b16 %v569, %v568
          %v585 = vpack.c.b16 %v571, %v570
          %v586 = vpack.c.b16 %v573, %v572
          %v587 = vpack.c.b16 %v575, %v574
          %v588 = vpack.c.b16 %v577, %v576
          %v589 = vpack.c.b16 %v579, %v578
          %v590 = vpack.c.b16 %v581, %v580
          %v591 = vpack.c.b16 %v583, %v582
          %600 = vmatpush.bf16.msra.mxu0 %v591
          %601 = vmatpush.bf16.msra.mxu0 %v590
          %602 = vmatpush.bf16.msra.mxu0 %v589
          %603 = vmatpush.bf16.msra.mxu0 %v588
          %604 = vmatpush.bf16.msra.mxu0 %v587
          %605 = vmatpush.bf16.msra.mxu0 %v586
          %606 = vmatpush.bf16.msra.mxu0 %v585
          %607 = vmatpush.bf16.msra.mxu0 %v584
          %608 = vmatmul.bf16.gmra.mxu0 %v488
          %v609 = vpop.f32.mrf.mxu0
          %v610 = vadd.f32 0.0, %v609
          %v611 = vpop.f32.mrf.mxu0
          %v612 = vadd.f32 0.0, %v611
          %613 = vmatmul.bf16.gmra.mxu0 %v489
          %v614 = vpop.f32.mrf.mxu0
          %v615 = vadd.f32 0.0, %v614
          %v616 = vpop.f32.mrf.mxu0
          %v617 = vadd.f32 0.0, %v616
          %618 = vmatmul.bf16.gmra.mxu0 %v490
          %v619 = vpop.f32.mrf.mxu0
          %v620 = vadd.f32 0.0, %v619
          %v621 = vpop.f32.mrf.mxu0
          %v622 = vadd.f32 0.0, %v621
          %623 = vmatmul.bf16.gmra.mxu0 %v491
          %v624 = vpop.f32.mrf.mxu0
          %v625 = vadd.f32 0.0, %v624
          %v626 = vpop.f32.mrf.mxu0
          %v627 = vadd.f32 0.0, %v626
          %628 = vmatmul.bf16.gmra.mxu0 %v492
          %v629 = vpop.f32.mrf.mxu0
          %v630 = vadd.f32 0.0, %v629
          %v631 = vpop.f32.mrf.mxu0
          %v632 = vadd.f32 0.0, %v631
          %633 = vmatmul.bf16.gmra.mxu0 %v493
          %v634 = vpop.f32.mrf.mxu0
          %v635 = vadd.f32 0.0, %v634
          %v636 = vpop.f32.mrf.mxu0
          %v637 = vadd.f32 0.0, %v636
          %638 = vmatmul.bf16.gmra.mxu0 %v494
          %v639 = vpop.f32.mrf.mxu0
          %v640 = vadd.f32 0.0, %v639
          %v641 = vpop.f32.mrf.mxu0
          %v642 = vadd.f32 0.0, %v641
          %643 = vmatmul.bf16.gmra.mxu0 %v495
          %v644 = vpop.f32.mrf.mxu0
          %v645 = vadd.f32 0.0, %v644
          %v646 = vpop.f32.mrf.mxu0
          %v647 = vadd.f32 0.0, %v646
          %648 = vmatmul.bf16.gmra.mxu0 %v496
          %v649 = vpop.f32.mrf.mxu0
          %v650 = vadd.f32 0.0, %v649
          %v651 = vpop.f32.mrf.mxu0
          %v652 = vadd.f32 0.0, %v651
          %653 = vmatmul.bf16.gmra.mxu0 %v497
          %v654 = vpop.f32.mrf.mxu0
          %v655 = vadd.f32 0.0, %v654
          %v656 = vpop.f32.mrf.mxu0
          %v657 = vadd.f32 0.0, %v656
          %658 = vmatmul.bf16.gmra.mxu0 %v498
          %v659 = vpop.f32.mrf.mxu0
          %v660 = vadd.f32 0.0, %v659
          %v661 = vpop.f32.mrf.mxu0
          %v662 = vadd.f32 0.0, %v661
          %663 = vmatmul.bf16.gmra.mxu0 %v499
          %v664 = vpop.f32.mrf.mxu0
          %v665 = vadd.f32 0.0, %v664
          %v666 = vpop.f32.mrf.mxu0
          %v667 = vadd.f32 0.0, %v666
          %668 = vmatmul.bf16.gmra.mxu0 %v500
          %v669 = vpop.f32.mrf.mxu0
          %v670 = vadd.f32 0.0, %v669
          %v671 = vpop.f32.mrf.mxu0
          %v672 = vadd.f32 0.0, %v671
          %673 = vmatmul.bf16.gmra.mxu0 %v501
          %v674 = vpop.f32.mrf.mxu0
          %v675 = vadd.f32 0.0, %v674
          %v676 = vpop.f32.mrf.mxu0
          %v677 = vadd.f32 0.0, %v676
          %678 = vmatmul.bf16.gmra.mxu0 %v502
          %v679 = vpop.f32.mrf.mxu0
          %v680 = vadd.f32 0.0, %v679
          %v681 = vpop.f32.mrf.mxu0
          %v682 = vadd.f32 0.0, %v681
          %683 = vmatmul.bf16.gmra.mxu0 %v503
          %v684 = vpop.f32.mrf.mxu0
          %v685 = vadd.f32 0.0, %v684
          %v686 = vpop.f32.mrf.mxu0
          %v687 = vadd.f32 0.0, %v686
          %688 = vmatmul.bf16.gmra.mxu0 %v504
          %v689 = vpop.f32.mrf.mxu0
          %v690 = vadd.f32 0.0, %v689
          %v691 = vpop.f32.mrf.mxu0
          %v692 = vadd.f32 0.0, %v691
          %693 = vmatmul.bf16.gmra.mxu0 %v505
          %v694 = vpop.f32.mrf.mxu0
          %v695 = vadd.f32 0.0, %v694
          %v696 = vpop.f32.mrf.mxu0
          %v697 = vadd.f32 0.0, %v696
          %698 = vmatmul.bf16.gmra.mxu0 %v506
          %v699 = vpop.f32.mrf.mxu0
          %v700 = vadd.f32 0.0, %v699
          %v701 = vpop.f32.mrf.mxu0
          %v702 = vadd.f32 0.0, %v701
          %703 = vmatmul.bf16.gmra.mxu0 %v507
          %v704 = vpop.f32.mrf.mxu0
          %v705 = vadd.f32 0.0, %v704
          %v706 = vpop.f32.mrf.mxu0
          %v707 = vadd.f32 0.0, %v706
          %708 = vmatmul.bf16.gmra.mxu0 %v508
          %v709 = vpop.f32.mrf.mxu0
          %v710 = vadd.f32 0.0, %v709
          %v711 = vpop.f32.mrf.mxu0
          %v712 = vadd.f32 0.0, %v711
          %713 = vmatmul.bf16.gmra.mxu0 %v509
          %v714 = vpop.f32.mrf.mxu0
          %v715 = vadd.f32 0.0, %v714
          %v716 = vpop.f32.mrf.mxu0
          %v717 = vadd.f32 0.0, %v716
          %718 = vmatmul.bf16.gmra.mxu0 %v510
          %v719 = vpop.f32.mrf.mxu0
          %v720 = vadd.f32 0.0, %v719
          %v721 = vpop.f32.mrf.mxu0
          %v722 = vadd.f32 0.0, %v721
          %723 = vmatmul.bf16.gmra.mxu0 %v511
          %v724 = vpop.f32.mrf.mxu0
          %v725 = vadd.f32 0.0, %v724
          %v726 = vpop.f32.mrf.mxu0
          %v727 = vadd.f32 0.0, %v726
          %728 = vmatmul.bf16.gmra.mxu0 %v512
          %v729 = vpop.f32.mrf.mxu0
          %v730 = vadd.f32 0.0, %v729
          %v731 = vpop.f32.mrf.mxu0
          %v732 = vadd.f32 0.0, %v731
          %733 = vmatmul.bf16.gmra.mxu0 %v513
          %v734 = vpop.f32.mrf.mxu0
          %v735 = vadd.f32 0.0, %v734
          %v736 = vpop.f32.mrf.mxu0
          %v737 = vadd.f32 0.0, %v736
          %738 = vmatmul.bf16.gmra.mxu0 %v514
          %v739 = vpop.f32.mrf.mxu0
          %v740 = vadd.f32 0.0, %v739
          %v741 = vpop.f32.mrf.mxu0
          %v742 = vadd.f32 0.0, %v741
          %743 = vmatmul.bf16.gmra.mxu0 %v515
          %v744 = vpop.f32.mrf.mxu0
          %v745 = vadd.f32 0.0, %v744
          %v746 = vpop.f32.mrf.mxu0
          %v747 = vadd.f32 0.0, %v746
          %748 = vmatmul.bf16.gmra.mxu0 %v516
          %v749 = vpop.f32.mrf.mxu0
          %v750 = vadd.f32 0.0, %v749
          %v751 = vpop.f32.mrf.mxu0
          %v752 = vadd.f32 0.0, %v751
          %753 = vmatmul.bf16.gmra.mxu0 %v517
          %v754 = vpop.f32.mrf.mxu0
          %v755 = vadd.f32 0.0, %v754
          %v756 = vpop.f32.mrf.mxu0
          %v757 = vadd.f32 0.0, %v756
          %758 = vmatmul.bf16.gmra.mxu0 %v518
          %v759 = vpop.f32.mrf.mxu0
          %v760 = vadd.f32 0.0, %v759
          %v761 = vpop.f32.mrf.mxu0
          %v762 = vadd.f32 0.0, %v761
          %763 = vmatmul.bf16.gmra.mxu0 %v519
          %v764 = vpop.f32.mrf.mxu0
          %v765 = vadd.f32 0.0, %v764
          %v766 = vpop.f32.mrf.mxu0
          %v767 = vadd.f32 0.0, %v766
          %768 = vdwg.mxu0
          %v769 = vpack.c.bf16 %v610, %v610
          %v770 = vpack.c.bf16 %v612, %v612
          %v771 = vpack.c.bf16 %v615, %v615
          %v772 = vpack.c.bf16 %v617, %v617
          %v773 = vpack.c.bf16 %v620, %v620
          %v774 = vpack.c.bf16 %v622, %v622
          %v775 = vpack.c.bf16 %v625, %v625
          %v776 = vpack.c.bf16 %v627, %v627
          %v777 = vpack.c.bf16 %v630, %v630
          %v778 = vpack.c.bf16 %v632, %v632
          %v779 = vpack.c.bf16 %v635, %v635
          %v780 = vpack.c.bf16 %v637, %v637
          %v781 = vpack.c.bf16 %v640, %v640
          %v782 = vpack.c.bf16 %v642, %v642
          %v783 = vpack.c.bf16 %v645, %v645
          %v784 = vpack.c.bf16 %v647, %v647
          %v785 = vpack.c.bf16 %v650, %v650
          %v786 = vpack.c.bf16 %v652, %v652
          %v787 = vpack.c.bf16 %v655, %v655
          %v788 = vpack.c.bf16 %v657, %v657
          %v789 = vpack.c.bf16 %v660, %v660
          %v790 = vpack.c.bf16 %v662, %v662
          %v791 = vpack.c.bf16 %v665, %v665
          %v792 = vpack.c.bf16 %v667, %v667
          %v793 = vpack.c.bf16 %v670, %v670
          %v794 = vpack.c.bf16 %v672, %v672
          %v795 = vpack.c.bf16 %v675, %v675
          %v796 = vpack.c.bf16 %v677, %v677
          %v797 = vpack.c.bf16 %v680, %v680
          %v798 = vpack.c.bf16 %v682, %v682
          %v799 = vpack.c.bf16 %v685, %v685
          %v800 = vpack.c.bf16 %v687, %v687
          %v801 = vpack.c.bf16 %v690, %v690
          %v802 = vpack.c.bf16 %v692, %v692
          %v803 = vpack.c.bf16 %v695, %v695
          %v804 = vpack.c.bf16 %v697, %v697
          %v805 = vpack.c.bf16 %v700, %v700
          %v806 = vpack.c.bf16 %v702, %v702
          %v807 = vpack.c.bf16 %v705, %v705
          %v808 = vpack.c.bf16 %v707, %v707
          %v809 = vpack.c.bf16 %v710, %v710
          %v810 = vpack.c.bf16 %v712, %v712
          %v811 = vpack.c.bf16 %v715, %v715
          %v812 = vpack.c.bf16 %v717, %v717
          %v813 = vpack.c.bf16 %v720, %v720
          %v814 = vpack.c.bf16 %v722, %v722
          %v815 = vpack.c.bf16 %v725, %v725
          %v816 = vpack.c.bf16 %v727, %v727
          %v817 = vpack.c.bf16 %v730, %v730
          %v818 = vpack.c.bf16 %v732, %v732
          %v819 = vpack.c.bf16 %v735, %v735
          %v820 = vpack.c.bf16 %v737, %v737
          %v821 = vpack.c.bf16 %v740, %v740
          %v822 = vpack.c.bf16 %v742, %v742
          %v823 = vpack.c.bf16 %v745, %v745
          %v824 = vpack.c.bf16 %v747, %v747
          %v825 = vpack.c.bf16 %v750, %v750
          %v826 = vpack.c.bf16 %v752, %v752
          %v827 = vpack.c.bf16 %v755, %v755
          %v828 = vpack.c.bf16 %v757, %v757
          %v829 = vpack.c.bf16 %v760, %v760
          %v830 = vpack.c.bf16 %v762, %v762
          %v831 = vpack.c.bf16 %v765, %v765
          %v832 = vpack.c.bf16 %v767, %v767
          %s833 = smul.addr %s276, 4
          %s834 = scalar_lea.vmem [#allocation2], %s833
          %835 = vst [vmem:[%s834] sm:$0xf] %v769
          %836 = vst [vmem:[%s834 + $0x4] sm:$0xf] %v770
          %837 = vst [vmem:[%s834 + $0x8] sm:$0xf] %v771
          %838 = vst [vmem:[%s834 + $0xc] sm:$0xf] %v772
          %839 = vst [vmem:[%s834 + $0x10] sm:$0xf] %v773
          %840 = vst [vmem:[%s834 + $0x14] sm:$0xf] %v774
          %841 = vst [vmem:[%s834 + $0x18] sm:$0xf] %v775
          %842 = vst [vmem:[%s834 + $0x1c] sm:$0xf] %v776
          %843 = vst [vmem:[%s834 + $0x20] sm:$0xf] %v777
          %844 = vst [vmem:[%s834 + $0x24] sm:$0xf] %v778
          %845 = vst [vmem:[%s834 + $0x28] sm:$0xf] %v779
          %846 = vst [vmem:[%s834 + $0x2c] sm:$0xf] %v780
          %847 = vst [vmem:[%s834 + $0x30] sm:$0xf] %v781
          %848 = vst [vmem:[%s834 + $0x34] sm:$0xf] %v782
          %849 = vst [vmem:[%s834 + $0x38] sm:$0xf] %v783
          %850 = vst [vmem:[%s834 + $0x3c] sm:$0xf] %v784
          %851 = vst [vmem:[%s834 + $0x40] sm:$0xf] %v785
          %852 = vst [vmem:[%s834 + $0x44] sm:$0xf] %v786
          %853 = vst [vmem:[%s834 + $0x48] sm:$0xf] %v787
          %854 = vst [vmem:[%s834 + $0x4c] sm:$0xf] %v788
          %855 = vst [vmem:[%s834 + $0x50] sm:$0xf] %v789
          %856 = vst [vmem:[%s834 + $0x54] sm:$0xf] %v790
          %857 = vst [vmem:[%s834 + $0x58] sm:$0xf] %v791
          %858 = vst [vmem:[%s834 + $0x5c] sm:$0xf] %v792
          %859 = vst [vmem:[%s834 + $0x60] sm:$0xf] %v793
          %860 = vst [vmem:[%s834 + $0x64] sm:$0xf] %v794
          %861 = vst [vmem:[%s834 + $0x68] sm:$0xf] %v795
          %862 = vst [vmem:[%s834 + $0x6c] sm:$0xf] %v796
          %863 = vst [vmem:[%s834 + $0x70] sm:$0xf] %v797
          %864 = vst [vmem:[%s834 + $0x74] sm:$0xf] %v798
          %865 = vst [vmem:[%s834 + $0x78] sm:$0xf] %v799
          %866 = vst [vmem:[%s834 + $0x7c] sm:$0xf] %v800
          %867 = vst [vmem:[%s834 + $0x80] sm:$0xf] %v801
          %868 = vst [vmem:[%s834 + $0x84] sm:$0xf] %v802
          %869 = vst [vmem:[%s834 + $0x88] sm:$0xf] %v803
          %870 = vst [vmem:[%s834 + $0x8c] sm:$0xf] %v804
          %871 = vst [vmem:[%s834 + $0x90] sm:$0xf] %v805
          %872 = vst [vmem:[%s834 + $0x94] sm:$0xf] %v806
          %873 = vst [vmem:[%s834 + $0x98] sm:$0xf] %v807
          %874 = vst [vmem:[%s834 + $0x9c] sm:$0xf] %v808
          %875 = vst [vmem:[%s834 + $0xa0] sm:$0xf] %v809
          %876 = vst [vmem:[%s834 + $0xa4] sm:$0xf] %v810
          %877 = vst [vmem:[%s834 + $0xa8] sm:$0xf] %v811
          %878 = vst [vmem:[%s834 + $0xac] sm:$0xf] %v812
          %879 = vst [vmem:[%s834 + $0xb0] sm:$0xf] %v813
          %880 = vst [vmem:[%s834 + $0xb4] sm:$0xf] %v814
          %881 = vst [vmem:[%s834 + $0xb8] sm:$0xf] %v815
          %882 = vst [vmem:[%s834 + $0xbc] sm:$0xf] %v816
          %883 = vst [vmem:[%s834 + $0xc0] sm:$0xf] %v817
          %884 = vst [vmem:[%s834 + $0xc4] sm:$0xf] %v818
          %885 = vst [vmem:[%s834 + $0xc8] sm:$0xf] %v819
          %886 = vst [vmem:[%s834 + $0xcc] sm:$0xf] %v820
          %887 = vst [vmem:[%s834 + $0xd0] sm:$0xf] %v821
          %888 = vst [vmem:[%s834 + $0xd4] sm:$0xf] %v822
          %889 = vst [vmem:[%s834 + $0xd8] sm:$0xf] %v823
          %890 = vst [vmem:[%s834 + $0xdc] sm:$0xf] %v824
          %891 = vst [vmem:[%s834 + $0xe0] sm:$0xf] %v825
          %892 = vst [vmem:[%s834 + $0xe4] sm:$0xf] %v826
          %893 = vst [vmem:[%s834 + $0xe8] sm:$0xf] %v827
          %894 = vst [vmem:[%s834 + $0xec] sm:$0xf] %v828
          %895 = vst [vmem:[%s834 + $0xf0] sm:$0xf] %v829
          %896 = vst [vmem:[%s834 + $0xf4] sm:$0xf] %v830
          %897 = vst [vmem:[%s834 + $0xf8] sm:$0xf] %v831
          %898 = vst [vmem:[%s834 + $0xfc] sm:$0xf] %v832
        $region52: #{tpu_custom_call.1} parent=35 // pred_fallthru
          _
        %p899 = scmp.eq.s32.totalorder %s27, 0
        // Predicated region
        $region53: #{tpu_custom_call.1} parent=35 // pred_check
          %p900 = pneg %p899
        $region54: #{tpu_custom_call.1} parent=35 // pred_check_branch
          %902 = sbr.rel (%p900) target = $region56
        $region55: #{tpu_custom_call.1} parent=35 // pred_region
          %903 = vst [vmem:[#allocation3] sm:$0xff] 0.0
          %904 = vst [vmem:[#allocation3 + $0x8] sm:$0xff] 0.0
          %905 = vst [vmem:[#allocation3 + $0x10] sm:$0xff] 0.0
          %906 = vst [vmem:[#allocation3 + $0x18] sm:$0xff] 0.0
          %907 = vst [vmem:[#allocation3 + $0x20] sm:$0xff] 0.0
          %908 = vst [vmem:[#allocation3 + $0x28] sm:$0xff] 0.0
          %909 = vst [vmem:[#allocation3 + $0x30] sm:$0xff] 0.0
          %910 = vst [vmem:[#allocation3 + $0x38] sm:$0xff] 0.0
          %911 = vst [vmem:[#allocation3 + $0x40] sm:$0xff] 0.0
          %912 = vst [vmem:[#allocation3 + $0x48] sm:$0xff] 0.0
          %913 = vst [vmem:[#allocation3 + $0x50] sm:$0xff] 0.0
          %914 = vst [vmem:[#allocation3 + $0x58] sm:$0xff] 0.0
          %915 = vst [vmem:[#allocation3 + $0x60] sm:$0xff] 0.0
          %916 = vst [vmem:[#allocation3 + $0x68] sm:$0xff] 0.0
          %917 = vst [vmem:[#allocation3 + $0x70] sm:$0xff] 0.0
          %918 = vst [vmem:[#allocation3 + $0x78] sm:$0xff] 0.0
          %919 = vst [vmem:[#allocation3 + $0x80] sm:$0xff] 0.0
          %920 = vst [vmem:[#allocation3 + $0x88] sm:$0xff] 0.0
          %921 = vst [vmem:[#allocation3 + $0x90] sm:$0xff] 0.0
          %922 = vst [vmem:[#allocation3 + $0x98] sm:$0xff] 0.0
          %923 = vst [vmem:[#allocation3 + $0xa0] sm:$0xff] 0.0
          %924 = vst [vmem:[#allocation3 + $0xa8] sm:$0xff] 0.0
          %925 = vst [vmem:[#allocation3 + $0xb0] sm:$0xff] 0.0
          %926 = vst [vmem:[#allocation3 + $0xb8] sm:$0xff] 0.0
          %927 = vst [vmem:[#allocation3 + $0xc0] sm:$0xff] 0.0
          %928 = vst [vmem:[#allocation3 + $0xc8] sm:$0xff] 0.0
          %929 = vst [vmem:[#allocation3 + $0xd0] sm:$0xff] 0.0
          %930 = vst [vmem:[#allocation3 + $0xd8] sm:$0xff] 0.0
          %931 = vst [vmem:[#allocation3 + $0xe0] sm:$0xff] 0.0
          %932 = vst [vmem:[#allocation3 + $0xe8] sm:$0xff] 0.0
          %933 = vst [vmem:[#allocation3 + $0xf0] sm:$0xff] 0.0
          %934 = vst [vmem:[#allocation3 + $0xf8] sm:$0xff] 0.0
        $region56: #{tpu_custom_call.1} parent=35 // pred_fallthru
          _
        %v935 = vld [vmem:[#allocation3] sm:$0xff]
        %v936 = vld [vmem:[#allocation3 + $0x8] sm:$0xff]
        %v937 = vld [vmem:[#allocation3 + $0x10] sm:$0xff]
        %v938 = vld [vmem:[#allocation3 + $0x18] sm:$0xff]
        %v939 = vld [vmem:[#allocation3 + $0x20] sm:$0xff]
        %v940 = vld [vmem:[#allocation3 + $0x28] sm:$0xff]
        %v941 = vld [vmem:[#allocation3 + $0x30] sm:$0xff]
        %v942 = vld [vmem:[#allocation3 + $0x38] sm:$0xff]
        %v943 = vld [vmem:[#allocation3 + $0x40] sm:$0xff]
        %v944 = vld [vmem:[#allocation3 + $0x48] sm:$0xff]
        %v945 = vld [vmem:[#allocation3 + $0x50] sm:$0xff]
        %v946 = vld [vmem:[#allocation3 + $0x58] sm:$0xff]
        %v947 = vld [vmem:[#allocation3 + $0x60] sm:$0xff]
        %v948 = vld [vmem:[#allocation3 + $0x68] sm:$0xff]
        %v949 = vld [vmem:[#allocation3 + $0x70] sm:$0xff]
        %v950 = vld [vmem:[#allocation3 + $0x78] sm:$0xff]
        %v951 = vld [vmem:[#allocation3 + $0x80] sm:$0xff]
        %v952 = vld [vmem:[#allocation3 + $0x88] sm:$0xff]
        %v953 = vld [vmem:[#allocation3 + $0x90] sm:$0xff]
        %v954 = vld [vmem:[#allocation3 + $0x98] sm:$0xff]
        %v955 = vld [vmem:[#allocation3 + $0xa0] sm:$0xff]
        %v956 = vld [vmem:[#allocation3 + $0xa8] sm:$0xff]
        %v957 = vld [vmem:[#allocation3 + $0xb0] sm:$0xff]
        %v958 = vld [vmem:[#allocation3 + $0xb8] sm:$0xff]
        %v959 = vld [vmem:[#allocation3 + $0xc0] sm:$0xff]
        %v960 = vld [vmem:[#allocation3 + $0xc8] sm:$0xff]
        %v961 = vld [vmem:[#allocation3 + $0xd0] sm:$0xff]
        %v962 = vld [vmem:[#allocation3 + $0xd8] sm:$0xff]
        %v963 = vld [vmem:[#allocation3 + $0xe0] sm:$0xff]
        %v964 = vld [vmem:[#allocation3 + $0xe8] sm:$0xff]
        %v965 = vld [vmem:[#allocation3 + $0xf0] sm:$0xff]
        %v966 = vld [vmem:[#allocation3 + $0xf8] sm:$0xff]
        %v967 = vld [vmem:[%s232] sm:$0xff]
        %v968 = vld [vmem:[%s232 + $0x8] sm:$0xff]
        %v969 = vld [vmem:[%s232 + $0x10] sm:$0xff]
        %v970 = vld [vmem:[%s232 + $0x18] sm:$0xff]
        %v971 = vld [vmem:[%s232 + $0x20] sm:$0xff]
        %v972 = vld [vmem:[%s232 + $0x28] sm:$0xff]
        %v973 = vld [vmem:[%s232 + $0x30] sm:$0xff]
        %v974 = vld [vmem:[%s232 + $0x38] sm:$0xff]
        %v975 = vld [vmem:[%s232 + $0x40] sm:$0xff]
        %v976 = vld [vmem:[%s232 + $0x48] sm:$0xff]
        %v977 = vld [vmem:[%s232 + $0x50] sm:$0xff]
        %v978 = vld [vmem:[%s232 + $0x58] sm:$0xff]
        %v979 = vld [vmem:[%s232 + $0x60] sm:$0xff]
        %v980 = vld [vmem:[%s232 + $0x68] sm:$0xff]
        %v981 = vld [vmem:[%s232 + $0x70] sm:$0xff]
        %v982 = vld [vmem:[%s232 + $0x78] sm:$0xff]
        %v983 = vld [vmem:[%s232 + $0x80] sm:$0xff]
        %v984 = vld [vmem:[%s232 + $0x88] sm:$0xff]
        %v985 = vld [vmem:[%s232 + $0x90] sm:$0xff]
        %v986 = vld [vmem:[%s232 + $0x98] sm:$0xff]
        %v987 = vld [vmem:[%s232 + $0xa0] sm:$0xff]
        %v988 = vld [vmem:[%s232 + $0xa8] sm:$0xff]
        %v989 = vld [vmem:[%s232 + $0xb0] sm:$0xff]
        %v990 = vld [vmem:[%s232 + $0xb8] sm:$0xff]
        %v991 = vld [vmem:[%s232 + $0xc0] sm:$0xff]
        %v992 = vld [vmem:[%s232 + $0xc8] sm:$0xff]
        %v993 = vld [vmem:[%s232 + $0xd0] sm:$0xff]
        %v994 = vld [vmem:[%s232 + $0xd8] sm:$0xff]
        %v995 = vld [vmem:[%s232 + $0xe0] sm:$0xff]
        %v996 = vld [vmem:[%s232 + $0xe8] sm:$0xff]
        %v997 = vld [vmem:[%s232 + $0xf0] sm:$0xff]
        %v998 = vld [vmem:[%s232 + $0xf8] sm:$0xff]
        %v999 = vld [vmem:[%s232 + $0x100] sm:$0xff]
        %v1000 = vld [vmem:[%s232 + $0x108] sm:$0xff]
        %v1001 = vld [vmem:[%s232 + $0x110] sm:$0xff]
        %v1002 = vld [vmem:[%s232 + $0x118] sm:$0xff]
        %v1003 = vld [vmem:[%s232 + $0x120] sm:$0xff]
        %v1004 = vld [vmem:[%s232 + $0x128] sm:$0xff]
        %v1005 = vld [vmem:[%s232 + $0x130] sm:$0xff]
        %v1006 = vld [vmem:[%s232 + $0x138] sm:$0xff]
        %v1007 = vld [vmem:[%s232 + $0x140] sm:$0xff]
        %v1008 = vld [vmem:[%s232 + $0x148] sm:$0xff]
        %v1009 = vld [vmem:[%s232 + $0x150] sm:$0xff]
        %v1010 = vld [vmem:[%s232 + $0x158] sm:$0xff]
        %v1011 = vld [vmem:[%s232 + $0x160] sm:$0xff]
        %v1012 = vld [vmem:[%s232 + $0x168] sm:$0xff]
        %v1013 = vld [vmem:[%s232 + $0x170] sm:$0xff]
        %v1014 = vld [vmem:[%s232 + $0x178] sm:$0xff]
        %v1015 = vld [vmem:[%s232 + $0x180] sm:$0xff]
        %v1016 = vld [vmem:[%s232 + $0x188] sm:$0xff]
        %v1017 = vld [vmem:[%s232 + $0x190] sm:$0xff]
        %v1018 = vld [vmem:[%s232 + $0x198] sm:$0xff]
        %v1019 = vld [vmem:[%s232 + $0x1a0] sm:$0xff]
        %v1020 = vld [vmem:[%s232 + $0x1a8] sm:$0xff]
        %v1021 = vld [vmem:[%s232 + $0x1b0] sm:$0xff]
        %v1022 = vld [vmem:[%s232 + $0x1b8] sm:$0xff]
        %v1023 = vld [vmem:[%s232 + $0x1c0] sm:$0xff]
        %v1024 = vld [vmem:[%s232 + $0x1c8] sm:$0xff]
        %v1025 = vld [vmem:[%s232 + $0x1d0] sm:$0xff]
        %v1026 = vld [vmem:[%s232 + $0x1d8] sm:$0xff]
        %v1027 = vld [vmem:[%s232 + $0x1e0] sm:$0xff]
        %v1028 = vld [vmem:[%s232 + $0x1e8] sm:$0xff]
        %v1029 = vld [vmem:[%s232 + $0x1f0] sm:$0xff]
        %v1030 = vld [vmem:[%s232 + $0x1f8] sm:$0xff]
        %s1031 = sshra.s32 %s271, 3
        %s1032 = sand.u32 %s271, 7
        %s1033 = smul.addr %s1031, 4
        %s1034 = scalar_lea.vmem [#allocation2], %s1033
        %v1035 = vld [vmem:[%s1034] sm:$0xf]
        %v1036 = vld [vmem:[%s1034 + $0x4] sm:$0xf]
        %v1037 = vld [vmem:[%s1034 + $0x8] sm:$0xf]
        %v1038 = vld [vmem:[%s1034 + $0xc] sm:$0xf]
        %v1039 = vld [vmem:[%s1034 + $0x10] sm:$0xf]
        %v1040 = vld [vmem:[%s1034 + $0x14] sm:$0xf]
        %v1041 = vld [vmem:[%s1034 + $0x18] sm:$0xf]
        %v1042 = vld [vmem:[%s1034 + $0x1c] sm:$0xf]
        %v1043 = vld [vmem:[%s1034 + $0x20] sm:$0xf]
        %v1044 = vld [vmem:[%s1034 + $0x24] sm:$0xf]
        %v1045 = vld [vmem:[%s1034 + $0x28] sm:$0xf]
        %v1046 = vld [vmem:[%s1034 + $0x2c] sm:$0xf]
        %v1047 = vld [vmem:[%s1034 + $0x30] sm:$0xf]
        %v1048 = vld [vmem:[%s1034 + $0x34] sm:$0xf]
        %v1049 = vld [vmem:[%s1034 + $0x38] sm:$0xf]
        %v1050 = vld [vmem:[%s1034 + $0x3c] sm:$0xf]
        %v1051 = vld [vmem:[%s1034 + $0x40] sm:$0xf]
        %v1052 = vld [vmem:[%s1034 + $0x44] sm:$0xf]
        %v1053 = vld [vmem:[%s1034 + $0x48] sm:$0xf]
        %v1054 = vld [vmem:[%s1034 + $0x4c] sm:$0xf]
        %v1055 = vld [vmem:[%s1034 + $0x50] sm:$0xf]
        %v1056 = vld [vmem:[%s1034 + $0x54] sm:$0xf]
        %v1057 = vld [vmem:[%s1034 + $0x58] sm:$0xf]
        %v1058 = vld [vmem:[%s1034 + $0x5c] sm:$0xf]
        %v1059 = vld [vmem:[%s1034 + $0x60] sm:$0xf]
        %v1060 = vld [vmem:[%s1034 + $0x64] sm:$0xf]
        %v1061 = vld [vmem:[%s1034 + $0x68] sm:$0xf]
        %v1062 = vld [vmem:[%s1034 + $0x6c] sm:$0xf]
        %v1063 = vld [vmem:[%s1034 + $0x70] sm:$0xf]
        %v1064 = vld [vmem:[%s1034 + $0x74] sm:$0xf]
        %v1065 = vld [vmem:[%s1034 + $0x78] sm:$0xf]
        %v1066 = vld [vmem:[%s1034 + $0x7c] sm:$0xf]
        %v1067 = vld [vmem:[%s1034 + $0x80] sm:$0xf]
        %v1068 = vld [vmem:[%s1034 + $0x84] sm:$0xf]
        %v1069 = vld [vmem:[%s1034 + $0x88] sm:$0xf]
        %v1070 = vld [vmem:[%s1034 + $0x8c] sm:$0xf]
        %v1071 = vld [vmem:[%s1034 + $0x90] sm:$0xf]
        %v1072 = vld [vmem:[%s1034 + $0x94] sm:$0xf]
        %v1073 = vld [vmem:[%s1034 + $0x98] sm:$0xf]
        %v1074 = vld [vmem:[%s1034 + $0x9c] sm:$0xf]
        %v1075 = vld [vmem:[%s1034 + $0xa0] sm:$0xf]
        %v1076 = vld [vmem:[%s1034 + $0xa4] sm:$0xf]
        %v1077 = vld [vmem:[%s1034 + $0xa8] sm:$0xf]
        %v1078 = vld [vmem:[%s1034 + $0xac] sm:$0xf]
        %v1079 = vld [vmem:[%s1034 + $0xb0] sm:$0xf]
        %v1080 = vld [vmem:[%s1034 + $0xb4] sm:$0xf]
        %v1081 = vld [vmem:[%s1034 + $0xb8] sm:$0xf]
        %v1082 = vld [vmem:[%s1034 + $0xbc] sm:$0xf]
        %v1083 = vld [vmem:[%s1034 + $0xc0] sm:$0xf]
        %v1084 = vld [vmem:[%s1034 + $0xc4] sm:$0xf]
        %v1085 = vld [vmem:[%s1034 + $0xc8] sm:$0xf]
        %v1086 = vld [vmem:[%s1034 + $0xcc] sm:$0xf]
        %v1087 = vld [vmem:[%s1034 + $0xd0] sm:$0xf]
        %v1088 = vld [vmem:[%s1034 + $0xd4] sm:$0xf]
        %v1089 = vld [vmem:[%s1034 + $0xd8] sm:$0xf]
        %v1090 = vld [vmem:[%s1034 + $0xdc] sm:$0xf]
        %v1091 = vld [vmem:[%s1034 + $0xe0] sm:$0xf]
        %v1092 = vld [vmem:[%s1034 + $0xe4] sm:$0xf]
        %v1093 = vld [vmem:[%s1034 + $0xe8] sm:$0xf]
        %v1094 = vld [vmem:[%s1034 + $0xec] sm:$0xf]
        %v1095 = vld [vmem:[%s1034 + $0xf0] sm:$0xf]
        %v1096 = vld [vmem:[%s1034 + $0xf4] sm:$0xf]
        %v1097 = vld [vmem:[%s1034 + $0xf8] sm:$0xf]
        %v1098 = vld [vmem:[%s1034 + $0xfc] sm:$0xf]
        %v1163 = vunpack.c.l.b16 %v967
        %v1164 = vunpack.c.h.b16 %v967
        %v1165 = vunpack.c.l.b16 %v968
        %v1166 = vunpack.c.h.b16 %v968
        %v1167 = vunpack.c.l.b16 %v969
        %v1168 = vunpack.c.h.b16 %v969
        %v1169 = vunpack.c.l.b16 %v970
        %v1170 = vunpack.c.h.b16 %v970
        %v1171 = vunpack.c.l.b16 %v971
        %v1172 = vunpack.c.h.b16 %v971
        %v1173 = vunpack.c.l.b16 %v972
        %v1174 = vunpack.c.h.b16 %v972
        %v1175 = vunpack.c.l.b16 %v973
        %v1176 = vunpack.c.h.b16 %v973
        %v1177 = vunpack.c.l.b16 %v974
        %v1178 = vunpack.c.h.b16 %v974
        %v1179 = vunpack.c.l.b16 %v975
        %v1180 = vunpack.c.h.b16 %v975
        %v1181 = vunpack.c.l.b16 %v976
        %v1182 = vunpack.c.h.b16 %v976
        %v1183 = vunpack.c.l.b16 %v977
        %v1184 = vunpack.c.h.b16 %v977
        %v1185 = vunpack.c.l.b16 %v978
        %v1186 = vunpack.c.h.b16 %v978
        %v1187 = vunpack.c.l.b16 %v979
        %v1188 = vunpack.c.h.b16 %v979
        %v1189 = vunpack.c.l.b16 %v980
        %v1190 = vunpack.c.h.b16 %v980
        %v1191 = vunpack.c.l.b16 %v981
        %v1192 = vunpack.c.h.b16 %v981
        %v1193 = vunpack.c.l.b16 %v982
        %v1194 = vunpack.c.h.b16 %v982
        %v1195 = vunpack.c.l.b16 %v983
        %v1196 = vunpack.c.h.b16 %v983
        %v1197 = vunpack.c.l.b16 %v984
        %v1198 = vunpack.c.h.b16 %v984
        %v1199 = vunpack.c.l.b16 %v985
        %v1200 = vunpack.c.h.b16 %v985
        %v1201 = vunpack.c.l.b16 %v986
        %v1202 = vunpack.c.h.b16 %v986
        %v1203 = vunpack.c.l.b16 %v987
        %v1204 = vunpack.c.h.b16 %v987
        %v1205 = vunpack.c.l.b16 %v988
        %v1206 = vunpack.c.h.b16 %v988
        %v1207 = vunpack.c.l.b16 %v989
        %v1208 = vunpack.c.h.b16 %v989
        %v1209 = vunpack.c.l.b16 %v990
        %v1210 = vunpack.c.h.b16 %v990
        %v1211 = vunpack.c.l.b16 %v991
        %v1212 = vunpack.c.h.b16 %v991
        %v1213 = vunpack.c.l.b16 %v992
        %v1214 = vunpack.c.h.b16 %v992
        %v1215 = vunpack.c.l.b16 %v993
        %v1216 = vunpack.c.h.b16 %v993
        %v1217 = vunpack.c.l.b16 %v994
        %v1218 = vunpack.c.h.b16 %v994
        %v1219 = vunpack.c.l.b16 %v995
        %v1220 = vunpack.c.h.b16 %v995
        %v1221 = vunpack.c.l.b16 %v996
        %v1222 = vunpack.c.h.b16 %v996
        %v1223 = vunpack.c.l.b16 %v997
        %v1224 = vunpack.c.h.b16 %v997
        %v1225 = vunpack.c.l.b16 %v998
        %v1226 = vunpack.c.h.b16 %v998
        %v1227 = vunpack.c.l.b16 %v999
        %v1228 = vunpack.c.h.b16 %v999
        %v1229 = vunpack.c.l.b16 %v1000
        %v1230 = vunpack.c.h.b16 %v1000
        %v1231 = vunpack.c.l.b16 %v1001
        %v1232 = vunpack.c.h.b16 %v1001
        %v1233 = vunpack.c.l.b16 %v1002
        %v1234 = vunpack.c.h.b16 %v1002
        %v1235 = vunpack.c.l.b16 %v1003
        %v1236 = vunpack.c.h.b16 %v1003
        %v1237 = vunpack.c.l.b16 %v1004
        %v1238 = vunpack.c.h.b16 %v1004
        %v1239 = vunpack.c.l.b16 %v1005
        %v1240 = vunpack.c.h.b16 %v1005
        %v1241 = vunpack.c.l.b16 %v1006
        %v1242 = vunpack.c.h.b16 %v1006
        %v1243 = vunpack.c.l.b16 %v1007
        %v1244 = vunpack.c.h.b16 %v1007
        %v1245 = vunpack.c.l.b16 %v1008
        %v1246 = vunpack.c.h.b16 %v1008
        %v1247 = vunpack.c.l.b16 %v1009
        %v1248 = vunpack.c.h.b16 %v1009
        %v1249 = vunpack.c.l.b16 %v1010
        %v1250 = vunpack.c.h.b16 %v1010
        %v1251 = vunpack.c.l.b16 %v1011
        %v1252 = vunpack.c.h.b16 %v1011
        %v1253 = vunpack.c.l.b16 %v1012
        %v1254 = vunpack.c.h.b16 %v1012
        %v1255 = vunpack.c.l.b16 %v1013
        %v1256 = vunpack.c.h.b16 %v1013
        %v1257 = vunpack.c.l.b16 %v1014
        %v1258 = vunpack.c.h.b16 %v1014
        %v1259 = vunpack.c.l.b16 %v1015
        %v1260 = vunpack.c.h.b16 %v1015
        %v1261 = vunpack.c.l.b16 %v1016
        %v1262 = vunpack.c.h.b16 %v1016
        %v1263 = vunpack.c.l.b16 %v1017
        %v1264 = vunpack.c.h.b16 %v1017
        %v1265 = vunpack.c.l.b16 %v1018
        %v1266 = vunpack.c.h.b16 %v1018
        %v1267 = vunpack.c.l.b16 %v1019
        %v1268 = vunpack.c.h.b16 %v1019
        %v1269 = vunpack.c.l.b16 %v1020
        %v1270 = vunpack.c.h.b16 %v1020
        %v1271 = vunpack.c.l.b16 %v1021
        %v1272 = vunpack.c.h.b16 %v1021
        %v1273 = vunpack.c.l.b16 %v1022
        %v1274 = vunpack.c.h.b16 %v1022
        %v1275 = vunpack.c.l.b16 %v1023
        %v1276 = vunpack.c.h.b16 %v1023
        %v1277 = vunpack.c.l.b16 %v1024
        %v1278 = vunpack.c.h.b16 %v1024
        %v1279 = vunpack.c.l.b16 %v1025
        %v1280 = vunpack.c.h.b16 %v1025
        %v1281 = vunpack.c.l.b16 %v1026
        %v1282 = vunpack.c.h.b16 %v1026
        %v1283 = vunpack.c.l.b16 %v1027
        %v1284 = vunpack.c.h.b16 %v1027
        %v1285 = vunpack.c.l.b16 %v1028
        %v1286 = vunpack.c.h.b16 %v1028
        %v1287 = vunpack.c.l.b16 %v1029
        %v1288 = vunpack.c.h.b16 %v1029
        %v1289 = vunpack.c.l.b16 %v1030
        %v1290 = vunpack.c.h.b16 %v1030
        %v1291 = vpack.c.b16 %v1167, %v1163
        %v1292 = vpack.c.b16 %v1168, %v1164
        %v1293 = vpack.c.b16 %v1169, %v1165
        %v1294 = vpack.c.b16 %v1170, %v1166
        %v1295 = vpack.c.b16 %v1175, %v1171
        %v1296 = vpack.c.b16 %v1176, %v1172
        %v1297 = vpack.c.b16 %v1177, %v1173
        %v1298 = vpack.c.b16 %v1178, %v1174
        %v1299 = vpack.c.b16 %v1183, %v1179
        %v1300 = vpack.c.b16 %v1184, %v1180
        %v1301 = vpack.c.b16 %v1185, %v1181
        %v1302 = vpack.c.b16 %v1186, %v1182
        %v1303 = vpack.c.b16 %v1191, %v1187
        %v1304 = vpack.c.b16 %v1192, %v1188
        %v1305 = vpack.c.b16 %v1193, %v1189
        %v1306 = vpack.c.b16 %v1194, %v1190
        %v1307 = vpack.c.b16 %v1199, %v1195
        %v1308 = vpack.c.b16 %v1200, %v1196
        %v1309 = vpack.c.b16 %v1201, %v1197
        %v1310 = vpack.c.b16 %v1202, %v1198
        %v1311 = vpack.c.b16 %v1207, %v1203
        %v1312 = vpack.c.b16 %v1208, %v1204
        %v1313 = vpack.c.b16 %v1209, %v1205
        %v1314 = vpack.c.b16 %v1210, %v1206
        %v1315 = vpack.c.b16 %v1215, %v1211
        %v1316 = vpack.c.b16 %v1216, %v1212
        %v1317 = vpack.c.b16 %v1217, %v1213
        %v1318 = vpack.c.b16 %v1218, %v1214
        %v1319 = vpack.c.b16 %v1223, %v1219
        %v1320 = vpack.c.b16 %v1224, %v1220
        %v1321 = vpack.c.b16 %v1225, %v1221
        %v1322 = vpack.c.b16 %v1226, %v1222
        %v1323 = vpack.c.b16 %v1231, %v1227
        %v1324 = vpack.c.b16 %v1232, %v1228
        %v1325 = vpack.c.b16 %v1233, %v1229
        %v1326 = vpack.c.b16 %v1234, %v1230
        %v1327 = vpack.c.b16 %v1239, %v1235
        %v1328 = vpack.c.b16 %v1240, %v1236
        %v1329 = vpack.c.b16 %v1241, %v1237
        %v1330 = vpack.c.b16 %v1242, %v1238
        %v1331 = vpack.c.b16 %v1247, %v1243
        %v1332 = vpack.c.b16 %v1248, %v1244
        %v1333 = vpack.c.b16 %v1249, %v1245
        %v1334 = vpack.c.b16 %v1250, %v1246
        %v1335 = vpack.c.b16 %v1255, %v1251
        %v1336 = vpack.c.b16 %v1256, %v1252
        %v1337 = vpack.c.b16 %v1257, %v1253
        %v1338 = vpack.c.b16 %v1258, %v1254
        %v1339 = vpack.c.b16 %v1263, %v1259
        %v1340 = vpack.c.b16 %v1264, %v1260
        %v1341 = vpack.c.b16 %v1265, %v1261
        %v1342 = vpack.c.b16 %v1266, %v1262
        %v1343 = vpack.c.b16 %v1271, %v1267
        %v1344 = vpack.c.b16 %v1272, %v1268
        %v1345 = vpack.c.b16 %v1273, %v1269
        %v1346 = vpack.c.b16 %v1274, %v1270
        %v1347 = vpack.c.b16 %v1279, %v1275
        %v1348 = vpack.c.b16 %v1280, %v1276
        %v1349 = vpack.c.b16 %v1281, %v1277
        %v1350 = vpack.c.b16 %v1282, %v1278
        %v1351 = vpack.c.b16 %v1287, %v1283
        %v1352 = vpack.c.b16 %v1288, %v1284
        %v1353 = vpack.c.b16 %v1289, %v1285
        %v1354 = vpack.c.b16 %v1290, %v1286
        %v1483 = vunpack.c.l.b16 %v1035
        %v1484 = vunpack.c.l.b16 %v1036
        %v1485 = vunpack.c.l.b16 %v1037
        %v1486 = vunpack.c.l.b16 %v1038
        %v1487 = vunpack.c.l.b16 %v1039
        %v1488 = vunpack.c.l.b16 %v1040
        %v1489 = vunpack.c.l.b16 %v1041
        %v1490 = vunpack.c.l.b16 %v1042
        %v1491 = vunpack.c.l.b16 %v1043
        %v1492 = vunpack.c.l.b16 %v1044
        %v1493 = vunpack.c.l.b16 %v1045
        %v1494 = vunpack.c.l.b16 %v1046
        %v1495 = vunpack.c.l.b16 %v1047
        %v1496 = vunpack.c.l.b16 %v1048
        %v1497 = vunpack.c.l.b16 %v1049
        %v1498 = vunpack.c.l.b16 %v1050
        %v1499 = vunpack.c.l.b16 %v1051
        %v1500 = vunpack.c.l.b16 %v1052
        %v1501 = vunpack.c.l.b16 %v1053
        %v1502 = vunpack.c.l.b16 %v1054
        %v1503 = vunpack.c.l.b16 %v1055
        %v1504 = vunpack.c.l.b16 %v1056
        %v1505 = vunpack.c.l.b16 %v1057
        %v1506 = vunpack.c.l.b16 %v1058
        %v1507 = vunpack.c.l.b16 %v1059
        %v1508 = vunpack.c.l.b16 %v1060
        %v1509 = vunpack.c.l.b16 %v1061
        %v1510 = vunpack.c.l.b16 %v1062
        %v1511 = vunpack.c.l.b16 %v1063
        %v1512 = vunpack.c.l.b16 %v1064
        %v1513 = vunpack.c.l.b16 %v1065
        %v1514 = vunpack.c.l.b16 %v1066
        %v1515 = vunpack.c.l.b16 %v1067
        %v1516 = vunpack.c.l.b16 %v1068
        %v1517 = vunpack.c.l.b16 %v1069
        %v1518 = vunpack.c.l.b16 %v1070
        %v1519 = vunpack.c.l.b16 %v1071
        %v1520 = vunpack.c.l.b16 %v1072
        %v1521 = vunpack.c.l.b16 %v1073
        %v1522 = vunpack.c.l.b16 %v1074
        %v1523 = vunpack.c.l.b16 %v1075
        %v1524 = vunpack.c.l.b16 %v1076
        %v1525 = vunpack.c.l.b16 %v1077
        %v1526 = vunpack.c.l.b16 %v1078
        %v1527 = vunpack.c.l.b16 %v1079
        %v1528 = vunpack.c.l.b16 %v1080
        %v1529 = vunpack.c.l.b16 %v1081
        %v1530 = vunpack.c.l.b16 %v1082
        %v1531 = vunpack.c.l.b16 %v1083
        %v1532 = vunpack.c.l.b16 %v1084
        %v1533 = vunpack.c.l.b16 %v1085
        %v1534 = vunpack.c.l.b16 %v1086
        %v1535 = vunpack.c.l.b16 %v1087
        %v1536 = vunpack.c.l.b16 %v1088
        %v1537 = vunpack.c.l.b16 %v1089
        %v1538 = vunpack.c.l.b16 %v1090
        %v1539 = vunpack.c.l.b16 %v1091
        %v1540 = vunpack.c.l.b16 %v1092
        %v1541 = vunpack.c.l.b16 %v1093
        %v1542 = vunpack.c.l.b16 %v1094
        %v1543 = vunpack.c.l.b16 %v1095
        %v1544 = vunpack.c.l.b16 %v1096
        %v1545 = vunpack.c.l.b16 %v1097
        %v1546 = vunpack.c.l.b16 %v1098
        %v1547 = vpack.c.b16 %v1484, %v1483
        %v1548 = vpack.c.b16 %v1486, %v1485
        %v1549 = vpack.c.b16 %v1488, %v1487
        %v1550 = vpack.c.b16 %v1490, %v1489
        %v1551 = vpack.c.b16 %v1492, %v1491
        %v1552 = vpack.c.b16 %v1494, %v1493
        %v1553 = vpack.c.b16 %v1496, %v1495
        %v1554 = vpack.c.b16 %v1498, %v1497
        %v1555 = vpack.c.b16 %v1500, %v1499
        %v1556 = vpack.c.b16 %v1502, %v1501
        %v1557 = vpack.c.b16 %v1504, %v1503
        %v1558 = vpack.c.b16 %v1506, %v1505
        %v1559 = vpack.c.b16 %v1508, %v1507
        %v1560 = vpack.c.b16 %v1510, %v1509
        %v1561 = vpack.c.b16 %v1512, %v1511
        %v1562 = vpack.c.b16 %v1514, %v1513
        %v1563 = vpack.c.b16 %v1516, %v1515
        %v1564 = vpack.c.b16 %v1518, %v1517
        %v1565 = vpack.c.b16 %v1520, %v1519
        %v1566 = vpack.c.b16 %v1522, %v1521
        %v1567 = vpack.c.b16 %v1524, %v1523
        %v1568 = vpack.c.b16 %v1526, %v1525
        %v1569 = vpack.c.b16 %v1528, %v1527
        %v1570 = vpack.c.b16 %v1530, %v1529
        %v1571 = vpack.c.b16 %v1532, %v1531
        %v1572 = vpack.c.b16 %v1534, %v1533
        %v1573 = vpack.c.b16 %v1536, %v1535
        %v1574 = vpack.c.b16 %v1538, %v1537
        %v1575 = vpack.c.b16 %v1540, %v1539
        %v1576 = vpack.c.b16 %v1542, %v1541
        %v1577 = vpack.c.b16 %v1544, %v1543
        %v1578 = vpack.c.b16 %v1546, %v1545
        %1611 = vmatpush.bf16.msra.mxu0 %v1554
        %1612 = vmatpush.bf16.msra.mxu0 %v1553
        %1613 = vmatpush.bf16.msra.mxu0 %v1552
        %1614 = vmatpush.bf16.msra.mxu0 %v1551
        %1615 = vmatpush.bf16.msra.mxu0 %v1550
        %1616 = vmatpush.bf16.msra.mxu0 %v1549
        %1617 = vmatpush.bf16.msra.mxu0 %v1548
        %1618 = vmatpush.bf16.msra.mxu0 %v1547
        %1619 = vmatmul.bf16.gmra.mxu0 %v1291
        %v1620 = vpop.f32.mrf.mxu0
        %v1621 = vadd.f32 0.0, %v1620
        %v1622 = vpop.f32.mrf.mxu0
        %v1623 = vadd.f32 0.0, %v1622
        %1624 = vmatmul.bf16.gmra.mxu0 %v1295
        %v1625 = vpop.f32.mrf.mxu0
        %v1626 = vadd.f32 0.0, %v1625
        %v1627 = vpop.f32.mrf.mxu0
        %v1628 = vadd.f32 0.0, %v1627
        %1629 = vmatmul.bf16.gmra.mxu0 %v1299
        %v1630 = vpop.f32.mrf.mxu0
        %v1631 = vadd.f32 0.0, %v1630
        %v1632 = vpop.f32.mrf.mxu0
        %v1633 = vadd.f32 0.0, %v1632
        %1634 = vmatmul.bf16.gmra.mxu0 %v1303
        %v1635 = vpop.f32.mrf.mxu0
        %v1636 = vadd.f32 0.0, %v1635
        %v1637 = vpop.f32.mrf.mxu0
        %v1638 = vadd.f32 0.0, %v1637
        %1639 = vmatmul.bf16.gmra.mxu0 %v1307
        %v1640 = vpop.f32.mrf.mxu0
        %v1641 = vadd.f32 0.0, %v1640
        %v1642 = vpop.f32.mrf.mxu0
        %v1643 = vadd.f32 0.0, %v1642
        %1644 = vmatmul.bf16.gmra.mxu0 %v1311
        %v1645 = vpop.f32.mrf.mxu0
        %v1646 = vadd.f32 0.0, %v1645
        %v1647 = vpop.f32.mrf.mxu0
        %v1648 = vadd.f32 0.0, %v1647
        %1649 = vmatmul.bf16.gmra.mxu0 %v1315
        %v1650 = vpop.f32.mrf.mxu0
        %v1651 = vadd.f32 0.0, %v1650
        %v1652 = vpop.f32.mrf.mxu0
        %v1653 = vadd.f32 0.0, %v1652
        %1654 = vmatmul.bf16.gmra.mxu0 %v1319
        %v1655 = vpop.f32.mrf.mxu0
        %v1656 = vadd.f32 0.0, %v1655
        %v1657 = vpop.f32.mrf.mxu0
        %v1658 = vadd.f32 0.0, %v1657
        %1659 = vmatmul.bf16.gmra.mxu0 %v1323
        %v1660 = vpop.f32.mrf.mxu0
        %v1661 = vadd.f32 0.0, %v1660
        %v1662 = vpop.f32.mrf.mxu0
        %v1663 = vadd.f32 0.0, %v1662
        %1664 = vmatmul.bf16.gmra.mxu0 %v1327
        %v1665 = vpop.f32.mrf.mxu0
        %v1666 = vadd.f32 0.0, %v1665
        %v1667 = vpop.f32.mrf.mxu0
        %v1668 = vadd.f32 0.0, %v1667
        %1669 = vmatmul.bf16.gmra.mxu0 %v1331
        %v1670 = vpop.f32.mrf.mxu0
        %v1671 = vadd.f32 0.0, %v1670
        %v1672 = vpop.f32.mrf.mxu0
        %v1673 = vadd.f32 0.0, %v1672
        %1674 = vmatmul.bf16.gmra.mxu0 %v1335
        %v1675 = vpop.f32.mrf.mxu0
        %v1676 = vadd.f32 0.0, %v1675
        %v1677 = vpop.f32.mrf.mxu0
        %v1678 = vadd.f32 0.0, %v1677
        %1679 = vmatmul.bf16.gmra.mxu0 %v1339
        %v1680 = vpop.f32.mrf.mxu0
        %v1681 = vadd.f32 0.0, %v1680
        %v1682 = vpop.f32.mrf.mxu0
        %v1683 = vadd.f32 0.0, %v1682
        %1684 = vmatmul.bf16.gmra.mxu0 %v1343
        %v1685 = vpop.f32.mrf.mxu0
        %v1686 = vadd.f32 0.0, %v1685
        %v1687 = vpop.f32.mrf.mxu0
        %v1688 = vadd.f32 0.0, %v1687
        %1689 = vmatmul.bf16.gmra.mxu0 %v1347
        %v1690 = vpop.f32.mrf.mxu0
        %v1691 = vadd.f32 0.0, %v1690
        %v1692 = vpop.f32.mrf.mxu0
        %v1693 = vadd.f32 0.0, %v1692
        %1694 = vmatmul.bf16.gmra.mxu0 %v1351
        %v1695 = vpop.f32.mrf.mxu0
        %v1696 = vadd.f32 0.0, %v1695
        %v1697 = vpop.f32.mrf.mxu0
        %v1698 = vadd.f32 0.0, %v1697
        %1699 = vdwg.mxu0
        %1700 = vmatpush.bf16.msra.mxu0 %v1562
        %1701 = vmatpush.bf16.msra.mxu0 %v1561
        %1702 = vmatpush.bf16.msra.mxu0 %v1560
        %1703 = vmatpush.bf16.msra.mxu0 %v1559
        %1704 = vmatpush.bf16.msra.mxu0 %v1558
        %1705 = vmatpush.bf16.msra.mxu0 %v1557
        %1706 = vmatpush.bf16.msra.mxu0 %v1556
        %1707 = vmatpush.bf16.msra.mxu0 %v1555
        %1708 = vmatmul.bf16.gmra.mxu0 %v1292
        %v1709 = vpop.f32.mrf.mxu0
        %v1710 = vadd.f32 %v1621, %v1709
        %v1711 = vpop.f32.mrf.mxu0
        %v1712 = vadd.f32 %v1623, %v1711
        %1713 = vmatmul.bf16.gmra.mxu0 %v1296
        %v1714 = vpop.f32.mrf.mxu0
        %v1715 = vadd.f32 %v1626, %v1714
        %v1716 = vpop.f32.mrf.mxu0
        %v1717 = vadd.f32 %v1628, %v1716
        %1718 = vmatmul.bf16.gmra.mxu0 %v1300
        %v1719 = vpop.f32.mrf.mxu0
        %v1720 = vadd.f32 %v1631, %v1719
        %v1721 = vpop.f32.mrf.mxu0
        %v1722 = vadd.f32 %v1633, %v1721
        %1723 = vmatmul.bf16.gmra.mxu0 %v1304
        %v1724 = vpop.f32.mrf.mxu0
        %v1725 = vadd.f32 %v1636, %v1724
        %v1726 = vpop.f32.mrf.mxu0
        %v1727 = vadd.f32 %v1638, %v1726
        %1728 = vmatmul.bf16.gmra.mxu0 %v1308
        %v1729 = vpop.f32.mrf.mxu0
        %v1730 = vadd.f32 %v1641, %v1729
        %v1731 = vpop.f32.mrf.mxu0
        %v1732 = vadd.f32 %v1643, %v1731
        %1733 = vmatmul.bf16.gmra.mxu0 %v1312
        %v1734 = vpop.f32.mrf.mxu0
        %v1735 = vadd.f32 %v1646, %v1734
        %v1736 = vpop.f32.mrf.mxu0
        %v1737 = vadd.f32 %v1648, %v1736
        %1738 = vmatmul.bf16.gmra.mxu0 %v1316
        %v1739 = vpop.f32.mrf.mxu0
        %v1740 = vadd.f32 %v1651, %v1739
        %v1741 = vpop.f32.mrf.mxu0
        %v1742 = vadd.f32 %v1653, %v1741
        %1743 = vmatmul.bf16.gmra.mxu0 %v1320
        %v1744 = vpop.f32.mrf.mxu0
        %v1745 = vadd.f32 %v1656, %v1744
        %v1746 = vpop.f32.mrf.mxu0
        %v1747 = vadd.f32 %v1658, %v1746
        %1748 = vmatmul.bf16.gmra.mxu0 %v1324
        %v1749 = vpop.f32.mrf.mxu0
        %v1750 = vadd.f32 %v1661, %v1749
        %v1751 = vpop.f32.mrf.mxu0
        %v1752 = vadd.f32 %v1663, %v1751
        %1753 = vmatmul.bf16.gmra.mxu0 %v1328
        %v1754 = vpop.f32.mrf.mxu0
        %v1755 = vadd.f32 %v1666, %v1754
        %v1756 = vpop.f32.mrf.mxu0
        %v1757 = vadd.f32 %v1668, %v1756
        %1758 = vmatmul.bf16.gmra.mxu0 %v1332
        %v1759 = vpop.f32.mrf.mxu0
        %v1760 = vadd.f32 %v1671, %v1759
        %v1761 = vpop.f32.mrf.mxu0
        %v1762 = vadd.f32 %v1673, %v1761
        %1763 = vmatmul.bf16.gmra.mxu0 %v1336
        %v1764 = vpop.f32.mrf.mxu0
        %v1765 = vadd.f32 %v1676, %v1764
        %v1766 = vpop.f32.mrf.mxu0
        %v1767 = vadd.f32 %v1678, %v1766
        %1768 = vmatmul.bf16.gmra.mxu0 %v1340
        %v1769 = vpop.f32.mrf.mxu0
        %v1770 = vadd.f32 %v1681, %v1769
        %v1771 = vpop.f32.mrf.mxu0
        %v1772 = vadd.f32 %v1683, %v1771
        %1773 = vmatmul.bf16.gmra.mxu0 %v1344
        %v1774 = vpop.f32.mrf.mxu0
        %v1775 = vadd.f32 %v1686, %v1774
        %v1776 = vpop.f32.mrf.mxu0
        %v1777 = vadd.f32 %v1688, %v1776
        %1778 = vmatmul.bf16.gmra.mxu0 %v1348
        %v1779 = vpop.f32.mrf.mxu0
        %v1780 = vadd.f32 %v1691, %v1779
        %v1781 = vpop.f32.mrf.mxu0
        %v1782 = vadd.f32 %v1693, %v1781
        %1783 = vmatmul.bf16.gmra.mxu0 %v1352
        %v1784 = vpop.f32.mrf.mxu0
        %v1785 = vadd.f32 %v1696, %v1784
        %v1786 = vpop.f32.mrf.mxu0
        %v1787 = vadd.f32 %v1698, %v1786
        %1788 = vdwg.mxu0
        %1789 = vmatpush.bf16.msra.mxu0 %v1570
        %1790 = vmatpush.bf16.msra.mxu0 %v1569
        %1791 = vmatpush.bf16.msra.mxu0 %v1568
        %1792 = vmatpush.bf16.msra.mxu0 %v1567
        %1793 = vmatpush.bf16.msra.mxu0 %v1566
        %1794 = vmatpush.bf16.msra.mxu0 %v1565
        %1795 = vmatpush.bf16.msra.mxu0 %v1564
        %1796 = vmatpush.bf16.msra.mxu0 %v1563
        %1797 = vmatmul.bf16.gmra.mxu0 %v1293
        %v1798 = vpop.f32.mrf.mxu0
        %v1799 = vadd.f32 %v1710, %v1798
        %v1800 = vpop.f32.mrf.mxu0
        %v1801 = vadd.f32 %v1712, %v1800
        %1802 = vmatmul.bf16.gmra.mxu0 %v1297
        %v1803 = vpop.f32.mrf.mxu0
        %v1804 = vadd.f32 %v1715, %v1803
        %v1805 = vpop.f32.mrf.mxu0
        %v1806 = vadd.f32 %v1717, %v1805
        %1807 = vmatmul.bf16.gmra.mxu0 %v1301
        %v1808 = vpop.f32.mrf.mxu0
        %v1809 = vadd.f32 %v1720, %v1808
        %v1810 = vpop.f32.mrf.mxu0
        %v1811 = vadd.f32 %v1722, %v1810
        %1812 = vmatmul.bf16.gmra.mxu0 %v1305
        %v1813 = vpop.f32.mrf.mxu0
        %v1814 = vadd.f32 %v1725, %v1813
        %v1815 = vpop.f32.mrf.mxu0
        %v1816 = vadd.f32 %v1727, %v1815
        %1817 = vmatmul.bf16.gmra.mxu0 %v1309
        %v1818 = vpop.f32.mrf.mxu0
        %v1819 = vadd.f32 %v1730, %v1818
        %v1820 = vpop.f32.mrf.mxu0
        %v1821 = vadd.f32 %v1732, %v1820
        %1822 = vmatmul.bf16.gmra.mxu0 %v1313
        %v1823 = vpop.f32.mrf.mxu0
        %v1824 = vadd.f32 %v1735, %v1823
        %v1825 = vpop.f32.mrf.mxu0
        %v1826 = vadd.f32 %v1737, %v1825
        %1827 = vmatmul.bf16.gmra.mxu0 %v1317
        %v1828 = vpop.f32.mrf.mxu0
        %v1829 = vadd.f32 %v1740, %v1828
        %v1830 = vpop.f32.mrf.mxu0
        %v1831 = vadd.f32 %v1742, %v1830
        %1832 = vmatmul.bf16.gmra.mxu0 %v1321
        %v1833 = vpop.f32.mrf.mxu0
        %v1834 = vadd.f32 %v1745, %v1833
        %v1835 = vpop.f32.mrf.mxu0
        %v1836 = vadd.f32 %v1747, %v1835
        %1837 = vmatmul.bf16.gmra.mxu0 %v1325
        %v1838 = vpop.f32.mrf.mxu0
        %v1839 = vadd.f32 %v1750, %v1838
        %v1840 = vpop.f32.mrf.mxu0
        %v1841 = vadd.f32 %v1752, %v1840
        %1842 = vmatmul.bf16.gmra.mxu0 %v1329
        %v1843 = vpop.f32.mrf.mxu0
        %v1844 = vadd.f32 %v1755, %v1843
        %v1845 = vpop.f32.mrf.mxu0
        %v1846 = vadd.f32 %v1757, %v1845
        %1847 = vmatmul.bf16.gmra.mxu0 %v1333
        %v1848 = vpop.f32.mrf.mxu0
        %v1849 = vadd.f32 %v1760, %v1848
        %v1850 = vpop.f32.mrf.mxu0
        %v1851 = vadd.f32 %v1762, %v1850
        %1852 = vmatmul.bf16.gmra.mxu0 %v1337
        %v1853 = vpop.f32.mrf.mxu0
        %v1854 = vadd.f32 %v1765, %v1853
        %v1855 = vpop.f32.mrf.mxu0
        %v1856 = vadd.f32 %v1767, %v1855
        %1857 = vmatmul.bf16.gmra.mxu0 %v1341
        %v1858 = vpop.f32.mrf.mxu0
        %v1859 = vadd.f32 %v1770, %v1858
        %v1860 = vpop.f32.mrf.mxu0
        %v1861 = vadd.f32 %v1772, %v1860
        %1862 = vmatmul.bf16.gmra.mxu0 %v1345
        %v1863 = vpop.f32.mrf.mxu0
        %v1864 = vadd.f32 %v1775, %v1863
        %v1865 = vpop.f32.mrf.mxu0
        %v1866 = vadd.f32 %v1777, %v1865
        %1867 = vmatmul.bf16.gmra.mxu0 %v1349
        %v1868 = vpop.f32.mrf.mxu0
        %v1869 = vadd.f32 %v1780, %v1868
        %v1870 = vpop.f32.mrf.mxu0
        %v1871 = vadd.f32 %v1782, %v1870
        %1872 = vmatmul.bf16.gmra.mxu0 %v1353
        %v1873 = vpop.f32.mrf.mxu0
        %v1874 = vadd.f32 %v1785, %v1873
        %v1875 = vpop.f32.mrf.mxu0
        %v1876 = vadd.f32 %v1787, %v1875
        %1877 = vdwg.mxu0
        %1878 = vmatpush.bf16.msra.mxu0 %v1578
        %1879 = vmatpush.bf16.msra.mxu0 %v1577
        %1880 = vmatpush.bf16.msra.mxu0 %v1576
        %1881 = vmatpush.bf16.msra.mxu0 %v1575
        %1882 = vmatpush.bf16.msra.mxu0 %v1574
        %1883 = vmatpush.bf16.msra.mxu0 %v1573
        %1884 = vmatpush.bf16.msra.mxu0 %v1572
        %1885 = vmatpush.bf16.msra.mxu0 %v1571
        %1886 = vmatmul.bf16.gmra.mxu0 %v1294
        %v1887 = vpop.f32.mrf.mxu0
        %v1888 = vadd.f32 %v1799, %v1887
        %v1889 = vpop.f32.mrf.mxu0
        %v1890 = vadd.f32 %v1801, %v1889
        %1891 = vmatmul.bf16.gmra.mxu0 %v1298
        %v1892 = vpop.f32.mrf.mxu0
        %v1893 = vadd.f32 %v1804, %v1892
        %v1894 = vpop.f32.mrf.mxu0
        %v1895 = vadd.f32 %v1806, %v1894
        %1896 = vmatmul.bf16.gmra.mxu0 %v1302
        %v1897 = vpop.f32.mrf.mxu0
        %v1898 = vadd.f32 %v1809, %v1897
        %v1899 = vpop.f32.mrf.mxu0
        %v1900 = vadd.f32 %v1811, %v1899
        %1901 = vmatmul.bf16.gmra.mxu0 %v1306
        %v1902 = vpop.f32.mrf.mxu0
        %v1903 = vadd.f32 %v1814, %v1902
        %v1904 = vpop.f32.mrf.mxu0
        %v1905 = vadd.f32 %v1816, %v1904
        %1906 = vmatmul.bf16.gmra.mxu0 %v1310
        %v1907 = vpop.f32.mrf.mxu0
        %v1908 = vadd.f32 %v1819, %v1907
        %v1909 = vpop.f32.mrf.mxu0
        %v1910 = vadd.f32 %v1821, %v1909
        %1911 = vmatmul.bf16.gmra.mxu0 %v1314
        %v1912 = vpop.f32.mrf.mxu0
        %v1913 = vadd.f32 %v1824, %v1912
        %v1914 = vpop.f32.mrf.mxu0
        %v1915 = vadd.f32 %v1826, %v1914
        %1916 = vmatmul.bf16.gmra.mxu0 %v1318
        %v1917 = vpop.f32.mrf.mxu0
        %v1918 = vadd.f32 %v1829, %v1917
        %v1919 = vpop.f32.mrf.mxu0
        %v1920 = vadd.f32 %v1831, %v1919
        %1921 = vmatmul.bf16.gmra.mxu0 %v1322
        %v1922 = vpop.f32.mrf.mxu0
        %v1923 = vadd.f32 %v1834, %v1922
        %v1924 = vpop.f32.mrf.mxu0
        %v1925 = vadd.f32 %v1836, %v1924
        %1926 = vmatmul.bf16.gmra.mxu0 %v1326
        %v1927 = vpop.f32.mrf.mxu0
        %v1928 = vadd.f32 %v1839, %v1927
        %v1929 = vpop.f32.mrf.mxu0
        %v1930 = vadd.f32 %v1841, %v1929
        %1931 = vmatmul.bf16.gmra.mxu0 %v1330
        %v1932 = vpop.f32.mrf.mxu0
        %v1933 = vadd.f32 %v1844, %v1932
        %v1934 = vpop.f32.mrf.mxu0
        %v1935 = vadd.f32 %v1846, %v1934
        %1936 = vmatmul.bf16.gmra.mxu0 %v1334
        %v1937 = vpop.f32.mrf.mxu0
        %v1938 = vadd.f32 %v1849, %v1937
        %v1939 = vpop.f32.mrf.mxu0
        %v1940 = vadd.f32 %v1851, %v1939
        %1941 = vmatmul.bf16.gmra.mxu0 %v1338
        %v1942 = vpop.f32.mrf.mxu0
        %v1943 = vadd.f32 %v1854, %v1942
        %v1944 = vpop.f32.mrf.mxu0
        %v1945 = vadd.f32 %v1856, %v1944
        %1946 = vmatmul.bf16.gmra.mxu0 %v1342
        %v1947 = vpop.f32.mrf.mxu0
        %v1948 = vadd.f32 %v1859, %v1947
        %v1949 = vpop.f32.mrf.mxu0
        %v1950 = vadd.f32 %v1861, %v1949
        %1951 = vmatmul.bf16.gmra.mxu0 %v1346
        %v1952 = vpop.f32.mrf.mxu0
        %v1953 = vadd.f32 %v1864, %v1952
        %v1954 = vpop.f32.mrf.mxu0
        %v1955 = vadd.f32 %v1866, %v1954
        %1956 = vmatmul.bf16.gmra.mxu0 %v1350
        %v1957 = vpop.f32.mrf.mxu0
        %v1958 = vadd.f32 %v1869, %v1957
        %v1959 = vpop.f32.mrf.mxu0
        %v1960 = vadd.f32 %v1871, %v1959
        %1961 = vmatmul.bf16.gmra.mxu0 %v1354
        %v1962 = vpop.f32.mrf.mxu0
        %v1963 = vadd.f32 %v1874, %v1962
        %v1964 = vpop.f32.mrf.mxu0
        %v1965 = vadd.f32 %v1876, %v1964
        %1966 = vdwg.mxu0
        %v1967 = vadd.f32 %v935, %v1888
        %v1968 = vadd.f32 %v936, %v1890
        %v1969 = vadd.f32 %v937, %v1893
        %v1970 = vadd.f32 %v938, %v1895
        %v1971 = vadd.f32 %v939, %v1898
        %v1972 = vadd.f32 %v940, %v1900
        %v1973 = vadd.f32 %v941, %v1903
        %v1974 = vadd.f32 %v942, %v1905
        %v1975 = vadd.f32 %v943, %v1908
        %v1976 = vadd.f32 %v944, %v1910
        %v1977 = vadd.f32 %v945, %v1913
        %v1978 = vadd.f32 %v946, %v1915
        %v1979 = vadd.f32 %v947, %v1918
        %v1980 = vadd.f32 %v948, %v1920
        %v1981 = vadd.f32 %v949, %v1923
        %v1982 = vadd.f32 %v950, %v1925
        %v1983 = vadd.f32 %v951, %v1928
        %v1984 = vadd.f32 %v952, %v1930
        %v1985 = vadd.f32 %v953, %v1933
        %v1986 = vadd.f32 %v954, %v1935
        %v1987 = vadd.f32 %v955, %v1938
        %v1988 = vadd.f32 %v956, %v1940
        %v1989 = vadd.f32 %v957, %v1943
        %v1990 = vadd.f32 %v958, %v1945
        %v1991 = vadd.f32 %v959, %v1948
        %v1992 = vadd.f32 %v960, %v1950
        %v1993 = vadd.f32 %v961, %v1953
        %v1994 = vadd.f32 %v962, %v1955
        %v1995 = vadd.f32 %v963, %v1958
        %v1996 = vadd.f32 %v964, %v1960
        %v1997 = vadd.f32 %v965, %v1963
        %v1998 = vadd.f32 %v966, %v1965
        %1999 = vst [vmem:[#allocation3] sm:$0xff] %v1967
        %2000 = vst [vmem:[#allocation3 + $0x8] sm:$0xff] %v1968
        %2001 = vst [vmem:[#allocation3 + $0x10] sm:$0xff] %v1969
        %2002 = vst [vmem:[#allocation3 + $0x18] sm:$0xff] %v1970
        %2003 = vst [vmem:[#allocation3 + $0x20] sm:$0xff] %v1971
        %2004 = vst [vmem:[#allocation3 + $0x28] sm:$0xff] %v1972
        %2005 = vst [vmem:[#allocation3 + $0x30] sm:$0xff] %v1973
        %2006 = vst [vmem:[#allocation3 + $0x38] sm:$0xff] %v1974
        %2007 = vst [vmem:[#allocation3 + $0x40] sm:$0xff] %v1975
        %2008 = vst [vmem:[#allocation3 + $0x48] sm:$0xff] %v1976
        %2009 = vst [vmem:[#allocation3 + $0x50] sm:$0xff] %v1977
        %2010 = vst [vmem:[#allocation3 + $0x58] sm:$0xff] %v1978
        %2011 = vst [vmem:[#allocation3 + $0x60] sm:$0xff] %v1979
        %2012 = vst [vmem:[#allocation3 + $0x68] sm:$0xff] %v1980
        %2013 = vst [vmem:[#allocation3 + $0x70] sm:$0xff] %v1981
        %2014 = vst [vmem:[#allocation3 + $0x78] sm:$0xff] %v1982
        %2015 = vst [vmem:[#allocation3 + $0x80] sm:$0xff] %v1983
        %2016 = vst [vmem:[#allocation3 + $0x88] sm:$0xff] %v1984
        %2017 = vst [vmem:[#allocation3 + $0x90] sm:$0xff] %v1985
        %2018 = vst [vmem:[#allocation3 + $0x98] sm:$0xff] %v1986
        %2019 = vst [vmem:[#allocation3 + $0xa0] sm:$0xff] %v1987
        %2020 = vst [vmem:[#allocation3 + $0xa8] sm:$0xff] %v1988
        %2021 = vst [vmem:[#allocation3 + $0xb0] sm:$0xff] %v1989
        %2022 = vst [vmem:[#allocation3 + $0xb8] sm:$0xff] %v1990
        %2023 = vst [vmem:[#allocation3 + $0xc0] sm:$0xff] %v1991
        %2024 = vst [vmem:[#allocation3 + $0xc8] sm:$0xff] %v1992
        %2025 = vst [vmem:[#allocation3 + $0xd0] sm:$0xff] %v1993
        %2026 = vst [vmem:[#allocation3 + $0xd8] sm:$0xff] %v1994
        %2027 = vst [vmem:[#allocation3 + $0xe0] sm:$0xff] %v1995
        %2028 = vst [vmem:[#allocation3 + $0xe8] sm:$0xff] %v1996
        %2029 = vst [vmem:[#allocation3 + $0xf0] sm:$0xff] %v1997
        %2030 = vst [vmem:[#allocation3 + $0xf8] sm:$0xff] %v1998
        // Predicated region
        $region57: #{tpu_custom_call.1} parent=35 // pred_check
          %p2031 = pneg %p899
        $region58: #{tpu_custom_call.1} parent=35 // pred_check_branch
          %2033 = sbr.rel (%p2031) target = $region60
        $region59: #{tpu_custom_call.1} parent=35 // pred_region
          %v2034 = vld [vmem:[#allocation3] sm:$0xff]
          %v2035 = vld [vmem:[#allocation3 + $0x8] sm:$0xff]
          %v2036 = vld [vmem:[#allocation3 + $0x10] sm:$0xff]
          %v2037 = vld [vmem:[#allocation3 + $0x18] sm:$0xff]
          %v2038 = vld [vmem:[#allocation3 + $0x20] sm:$0xff]
          %v2039 = vld [vmem:[#allocation3 + $0x28] sm:$0xff]
          %v2040 = vld [vmem:[#allocation3 + $0x30] sm:$0xff]
          %v2041 = vld [vmem:[#allocation3 + $0x38] sm:$0xff]
          %v2042 = vld [vmem:[#allocation3 + $0x40] sm:$0xff]
          %v2043 = vld [vmem:[#allocation3 + $0x48] sm:$0xff]
          %v2044 = vld [vmem:[#allocation3 + $0x50] sm:$0xff]
          %v2045 = vld [vmem:[#allocation3 + $0x58] sm:$0xff]
          %v2046 = vld [vmem:[#allocation3 + $0x60] sm:$0xff]
          %v2047 = vld [vmem:[#allocation3 + $0x68] sm:$0xff]
          %v2048 = vld [vmem:[#allocation3 + $0x70] sm:$0xff]
          %v2049 = vld [vmem:[#allocation3 + $0x78] sm:$0xff]
          %v2050 = vld [vmem:[#allocation3 + $0x80] sm:$0xff]
          %v2051 = vld [vmem:[#allocation3 + $0x88] sm:$0xff]
          %v2052 = vld [vmem:[#allocation3 + $0x90] sm:$0xff]
          %v2053 = vld [vmem:[#allocation3 + $0x98] sm:$0xff]
          %v2054 = vld [vmem:[#allocation3 + $0xa0] sm:$0xff]
          %v2055 = vld [vmem:[#allocation3 + $0xa8] sm:$0xff]
          %v2056 = vld [vmem:[#allocation3 + $0xb0] sm:$0xff]
          %v2057 = vld [vmem:[#allocation3 + $0xb8] sm:$0xff]
          %v2058 = vld [vmem:[#allocation3 + $0xc0] sm:$0xff]
          %v2059 = vld [vmem:[#allocation3 + $0xc8] sm:$0xff]
          %v2060 = vld [vmem:[#allocation3 + $0xd0] sm:$0xff]
          %v2061 = vld [vmem:[#allocation3 + $0xd8] sm:$0xff]
          %v2062 = vld [vmem:[#allocation3 + $0xe0] sm:$0xff]
          %v2063 = vld [vmem:[#allocation3 + $0xe8] sm:$0xff]
          %v2064 = vld [vmem:[#allocation3 + $0xf0] sm:$0xff]
          %v2065 = vld [vmem:[#allocation3 + $0xf8] sm:$0xff]
          %v2066 = vld [vmem:[%s3] sm:$0x1]
          %v2068 = vperm.slane %v2066, 0
          %v2070 = vadd.f32 %v2034, %v2068
          %v2071 = vadd.f32 %v2035, %v2068
          %v2072 = vadd.f32 %v2036, %v2068
          %v2073 = vadd.f32 %v2037, %v2068
          %v2074 = vadd.f32 %v2038, %v2068
          %v2075 = vadd.f32 %v2039, %v2068
          %v2076 = vadd.f32 %v2040, %v2068
          %v2077 = vadd.f32 %v2041, %v2068
          %v2078 = vadd.f32 %v2042, %v2068
          %v2079 = vadd.f32 %v2043, %v2068
          %v2080 = vadd.f32 %v2044, %v2068
          %v2081 = vadd.f32 %v2045, %v2068
          %v2082 = vadd.f32 %v2046, %v2068
          %v2083 = vadd.f32 %v2047, %v2068
          %v2084 = vadd.f32 %v2048, %v2068
          %v2085 = vadd.f32 %v2049, %v2068
          %v2086 = vadd.f32 %v2050, %v2068
          %v2087 = vadd.f32 %v2051, %v2068
          %v2088 = vadd.f32 %v2052, %v2068
          %v2089 = vadd.f32 %v2053, %v2068
          %v2090 = vadd.f32 %v2054, %v2068
          %v2091 = vadd.f32 %v2055, %v2068
          %v2092 = vadd.f32 %v2056, %v2068
          %v2093 = vadd.f32 %v2057, %v2068
          %v2094 = vadd.f32 %v2058, %v2068
          %v2095 = vadd.f32 %v2059, %v2068
          %v2096 = vadd.f32 %v2060, %v2068
          %v2097 = vadd.f32 %v2061, %v2068
          %v2098 = vadd.f32 %v2062, %v2068
          %v2099 = vadd.f32 %v2063, %v2068
          %v2100 = vadd.f32 %v2064, %v2068
          %v2101 = vadd.f32 %v2065, %v2068
          %v2102 = vmax.f32 %v2070, 0.0
          %v2103 = vmax.f32 %v2071, 0.0
          %v2104 = vmax.f32 %v2072, 0.0
          %v2105 = vmax.f32 %v2073, 0.0
          %v2106 = vmax.f32 %v2074, 0.0
          %v2107 = vmax.f32 %v2075, 0.0
          %v2108 = vmax.f32 %v2076, 0.0
          %v2109 = vmax.f32 %v2077, 0.0
          %v2110 = vmax.f32 %v2078, 0.0
          %v2111 = vmax.f32 %v2079, 0.0
          %v2112 = vmax.f32 %v2080, 0.0
          %v2113 = vmax.f32 %v2081, 0.0
          %v2114 = vmax.f32 %v2082, 0.0
          %v2115 = vmax.f32 %v2083, 0.0
          %v2116 = vmax.f32 %v2084, 0.0
          %v2117 = vmax.f32 %v2085, 0.0
          %v2118 = vmax.f32 %v2086, 0.0
          %v2119 = vmax.f32 %v2087, 0.0
          %v2120 = vmax.f32 %v2088, 0.0
          %v2121 = vmax.f32 %v2089, 0.0
          %v2122 = vmax.f32 %v2090, 0.0
          %v2123 = vmax.f32 %v2091, 0.0
          %v2124 = vmax.f32 %v2092, 0.0
          %v2125 = vmax.f32 %v2093, 0.0
          %v2126 = vmax.f32 %v2094, 0.0
          %v2127 = vmax.f32 %v2095, 0.0
          %v2128 = vmax.f32 %v2096, 0.0
          %v2129 = vmax.f32 %v2097, 0.0
          %v2130 = vmax.f32 %v2098, 0.0
          %v2131 = vmax.f32 %v2099, 0.0
          %v2132 = vmax.f32 %v2100, 0.0
          %v2133 = vmax.f32 %v2101, 0.0
          %2134 = vst [vmem:[%s267] sm:$0xff] %v2102
          %2135 = vst [vmem:[%s267 + $0x8] sm:$0xff] %v2103
          %2136 = vst [vmem:[%s267 + $0x10] sm:$0xff] %v2104
          %2137 = vst [vmem:[%s267 + $0x18] sm:$0xff] %v2105
          %2138 = vst [vmem:[%s267 + $0x20] sm:$0xff] %v2106
          %2139 = vst [vmem:[%s267 + $0x28] sm:$0xff] %v2107
          %2140 = vst [vmem:[%s267 + $0x30] sm:$0xff] %v2108
          %2141 = vst [vmem:[%s267 + $0x38] sm:$0xff] %v2109
          %2142 = vst [vmem:[%s267 + $0x40] sm:$0xff] %v2110
          %2143 = vst [vmem:[%s267 + $0x48] sm:$0xff] %v2111
          %2144 = vst [vmem:[%s267 + $0x50] sm:$0xff] %v2112
          %2145 = vst [vmem:[%s267 + $0x58] sm:$0xff] %v2113
          %2146 = vst [vmem:[%s267 + $0x60] sm:$0xff] %v2114
          %2147 = vst [vmem:[%s267 + $0x68] sm:$0xff] %v2115
          %2148 = vst [vmem:[%s267 + $0x70] sm:$0xff] %v2116
          %2149 = vst [vmem:[%s267 + $0x78] sm:$0xff] %v2117
          %2150 = vst [vmem:[%s267 + $0x80] sm:$0xff] %v2118
          %2151 = vst [vmem:[%s267 + $0x88] sm:$0xff] %v2119
          %2152 = vst [vmem:[%s267 + $0x90] sm:$0xff] %v2120
          %2153 = vst [vmem:[%s267 + $0x98] sm:$0xff] %v2121
          %2154 = vst [vmem:[%s267 + $0xa0] sm:$0xff] %v2122
          %2155 = vst [vmem:[%s267 + $0xa8] sm:$0xff] %v2123
          %2156 = vst [vmem:[%s267 + $0xb0] sm:$0xff] %v2124
          %2157 = vst [vmem:[%s267 + $0xb8] sm:$0xff] %v2125
          %2158 = vst [vmem:[%s267 + $0xc0] sm:$0xff] %v2126
          %2159 = vst [vmem:[%s267 + $0xc8] sm:$0xff] %v2127
          %2160 = vst [vmem:[%s267 + $0xd0] sm:$0xff] %v2128
          %2161 = vst [vmem:[%s267 + $0xd8] sm:$0xff] %v2129
          %2162 = vst [vmem:[%s267 + $0xe0] sm:$0xff] %v2130
          %2163 = vst [vmem:[%s267 + $0xe8] sm:$0xff] %v2131
          %2164 = vst [vmem:[%s267 + $0xf0] sm:$0xff] %v2132
          %2165 = vst [vmem:[%s267 + $0xf8] sm:$0xff] %v2133
        $region60: #{tpu_custom_call.1} parent=35 // pred_fallthru
          _
        %s2166 = sand.u32 %s133, 1
        %s2167 = scalar_lea.sflag [#allocation6], %s2166
        %s2168 = sand.u32 %s133, 1
        %s2169 = smul.addr %s2168, 256
        %s2170 = scalar_lea.vmem [#allocation10], %s2169
        // Predicated region
        $region61: #{tpu_custom_call.1} parent=35 // pred_check
          %p2171 = pneg %p143
        $region62: #{tpu_custom_call.1} parent=35 // pred_check_branch
          %2173 = sbr.rel (%p2171) target = $region64
        $region63: #{tpu_custom_call.1} parent=35 // pred_region
          %s2174 = smul.u32 32, %s26
          %2176 = vsyncadd %s2167, 0
          %s2177 = smul.addr %s2174, 8
          %s2178 = scalar_lea.hbm %s4, %s2177
          %s2179 = sshll.u32 %s2170, 4
          %s2180 = int_to_ptr.vmem [resolvable:$true] %s2179
          %s2181 = sshll.u32 %s2178, 4
          %s2182 = int_to_ptr.hbm [resolvable:$true] %s2181
          %2187 = dma.vmem_to_hbm [thread:$0]  %s2180, 4096, %s2182, %s2167, 128, 128, 8
        $region64: #{tpu_custom_call.1} parent=35 // pred_fallthru
          _
      $region36: #{tpu_custom_call.1} parent=5 // pred_fallthru
        _
      %p2188 = scmp.le.s32.totalorder 2, %s17
      // Predicated region
      $region65: #{tpu_custom_call.1} parent=5 // pred_check
        %p2189 = pneg %p2188
      $region66: #{tpu_custom_call.1} parent=5 // pred_check_branch
        %2191 = sbr.rel (%p2189) target = $region68
      $region67: #{tpu_custom_call.1} parent=5 // pred_region
        %s2192 = ssub.s32 %s17, 2
        // Predicated region
        $region69: #{tpu_custom_call.1} parent=67 // pred_check
          %p2193 = pneg %p149
        $region70: #{tpu_custom_call.1} parent=67 // pred_check_branch
          %2195 = sbr.rel (%p2193) target = $region72
        $region71: #{tpu_custom_call.1} parent=67 // pred_region
          %s2196 = sand.u32 %s134, 1
          %s2197 = scalar_lea.sflag [#allocation6], %s2196
          %s2198 = sand.u32 %s134, 1
          %s2199 = smul.addr %s2198, 256
          %s2200 = scalar_lea.vmem [#allocation10], %s2199
          %2202 = dma.done %s2197, 4096
        $region72: #{tpu_custom_call.1} parent=67 // pred_fallthru
          _
      $region68: #{tpu_custom_call.1} parent=5 // pred_fallthru
        _
    $region6: #{tpu_custom_call.1} parent=1 // loop_footer
      %s21 = sadd.s32 1, %s17
    $region7: #{tpu_custom_call.1} parent=1 // loop_footer_branch
      %16 = sbr.rel target = $region3
    $region8: #{tpu_custom_call.1} parent=1 // loop_exit
      _
    %2203 = vsyncpa [#allocation5], 1
    %s2204 = scalar_lea.sflag [#allocation5], 1
    %2205 = vsyncpa %s2204, 1
    %2206 = vsyncpa [#allocation8], 1
    %2207 = vsyncpa [#allocation6], 1
    %s2208 = scalar_lea.sflag [#allocation6], 1
    %2209 = vsyncpa %s2208, 1

</llo_original>
